<compile_context>
chip_gen: v5e
topology: v5e:2x2
jax: 0.10.0
libtpu: 0.0.40
codegen_flags: <defaults>
</compile_context>

<pallas_src>
import math

import jax
import jax.numpy as jnp
from jax.experimental import pallas as pl
from jax.experimental.pallas import tpu as pltpu

# ---- small synthetic "BERT" config (no checkpoint loading) ----
VOCAB = 64
MAX_POS = 16
TYPE_VOCAB = 2
HIDDEN = 32
NUM_HEADS = 2
HEAD_DIM = HIDDEN // NUM_HEADS
INTERMEDIATE = 64
NUM_LAYERS = 2
NUM_CLASSES = 3
LN_EPS = 1e-12


# ---------------- in-kernel helpers (fp32 element-wise math) ----------------

def _layernorm(x, g, b):
    mu = jnp.mean(x, axis=-1, keepdims=True)
    var = jnp.mean(jnp.square(x - mu), axis=-1, keepdims=True)
    return (x - mu) * jax.lax.rsqrt(var + LN_EPS) * g + b


def _gelu_tanh(x):
    # TODO(synk): HF BERT default is erf-GELU; tanh approximation kept for robust Mosaic lowering.
    return 0.5 * x * (1.0 + jnp.tanh(0.7978845608028654 * (x + 0.044715 * x * x * x)))


# ---------------- fused Pallas kernel (one batch row per grid step) ----------------

def _bert_fused_kernel(emb_ref, mask_ref,
                       emb_g_ref, emb_b_ref,
                       wqkv_ref, bqkv_ref,
                       wo_ref, bo_ref,
                       ln1g_ref, ln1b_ref,
                       wi_ref, bi_ref,
                       wfo_ref, bfo_ref,
                       ln2g_ref, ln2b_ref,
                       poolw_ref, poolb_ref,
                       fcw_ref, fcb_ref,
                       out_ref):
    NH, Dh = NUM_HEADS, HEAD_DIM
    S = emb_ref.shape[1]
    scale = 1.0 / math.sqrt(Dh)

    # embedding LayerNorm for this batch row
    x = _layernorm(emb_ref[0].astype(jnp.float32), emb_g_ref[...], emb_b_ref[...])   # (S, H) fp32
    neg_mask = mask_ref[0]                                                           # (1, S) additive

    # NUM_LAYERS == 2 -> statically unrolled; all layer weights VMEM-resident.
    for l in range(NUM_LAYERS):
        # ---- fused QKV: (q,k,v) x heads live on the LEADING batch dim of ONE batched matmul ----
        xb = jnp.broadcast_to(x.astype(jnp.bfloat16)[None], (3 * NH, S, HIDDEN))     # bf16 operand
        qkv = jax.lax.dot_general(
            xb, wqkv_ref[l],
            dimension_numbers=(((2,), (1,)), ((0,), (0,))),
            preferred_element_type=jnp.float32) + bqkv_ref[l]                        # (3NH, S, Dh)
        qh = qkv[0 * NH:1 * NH]            # leading-dim slices: no lane shuffles
        kh = qkv[1 * NH:2 * NH]
        vh = qkv[2 * NH:3 * NH]

        # ---- attention scores / softmax / context, batched over heads ----
        s = jax.lax.dot_general(
            qh.astype(jnp.bfloat16), kh.astype(jnp.bfloat16),
            dimension_numbers=(((2,), (2,)), ((0,), (0,))),
            preferred_element_type=jnp.float32) * scale                              # (NH, S, S)
        s = s + neg_mask[:, None, :]                                                 # key-side mask
        mmax = jnp.max(s, axis=-1, keepdims=True)
        p = jnp.exp(s - mmax)
        denom = jnp.sum(p, axis=-1, keepdims=True)
        p = p * pl.reciprocal(denom, approx=True)                                    # EUP divide

        ctx = jax.lax.dot_general(
            p.astype(jnp.bfloat16), vh.astype(jnp.bfloat16),
            dimension_numbers=(((2,), (1,)), ((0,), (0,))),
            preferred_element_type=jnp.float32)                                      # (NH, S, Dh)

        # ---- output projection via per-head weight slabs; heads reduced with a VPU add ----
        attn = jax.lax.dot_general(
            ctx.astype(jnp.bfloat16), wo_ref[l],
            dimension_numbers=(((2,), (1,)), ((0,), (0,))),
            preferred_element_type=jnp.float32)                                      # (NH, S, H)
        attn_out = jnp.sum(attn, axis=0) + bo_ref[l]                                 # (S, H)
        x = _layernorm(attn_out + x, ln1g_ref[l], ln1b_ref[l])

        # ---- feed-forward (GELU) + residual + LayerNorm ----
        inter = jnp.dot(x.astype(jnp.bfloat16), wi_ref[l],
                        preferred_element_type=jnp.float32) + bi_ref[l]
        inter = _gelu_tanh(inter)
        ffn = jnp.dot(inter.astype(jnp.bfloat16), wfo_ref[l],
                      preferred_element_type=jnp.float32) + bfo_ref[l]
        x = _layernorm(ffn + x, ln2g_ref[l], ln2b_ref[l])

    # ---- pooler: [CLS] is simply row 0 of this batch block ----
    cls = x[0:1, :]                                                                  # (1, H)
    pooled = jnp.tanh(jnp.dot(cls.astype(jnp.bfloat16), poolw_ref[...],
                              preferred_element_type=jnp.float32) + poolb_ref[...])
    # dropout(0.1): identity in eval mode (deterministic forward)
    logits = jnp.dot(pooled.astype(jnp.bfloat16), fcw_ref[...],
                     preferred_element_type=jnp.float32) + fcb_ref[...]
    out_ref[0] = logits.astype(out_ref.dtype)


# ---------------- parameter init (deterministic, synthetic) ----------------

def _dense(key, fan_in, fan_out):
    return jax.random.normal(key, (fan_in, fan_out), jnp.float32) * 0.02


def init_params(key):
    keys = iter(jax.random.split(key, 8 + 8 * NUM_LAYERS))
    p = {
        "word_emb": jax.random.normal(next(keys), (VOCAB, HIDDEN), jnp.float32) * 0.02,
        "pos_emb": jax.random.normal(next(keys), (MAX_POS, HIDDEN), jnp.float32) * 0.02,
        "type_emb": jax.random.normal(next(keys), (TYPE_VOCAB, HIDDEN), jnp.float32) * 0.02,
        "emb_ln_g": jnp.ones((HIDDEN,), jnp.float32),
        "emb_ln_b": jnp.zeros((HIDDEN,), jnp.float32),
        "layers": [],
        "pool_w": _dense(next(keys), HIDDEN, HIDDEN),
        "pool_b": jnp.zeros((HIDDEN,), jnp.float32),
        "fc_w": _dense(next(keys), HIDDEN, NUM_CLASSES),
        "fc_b": jnp.zeros((NUM_CLASSES,), jnp.float32),
    }
    for _ in range(NUM_LAYERS):
        p["layers"].append({
            "q_w": _dense(next(keys), HIDDEN, HIDDEN), "q_b": jnp.zeros((HIDDEN,), jnp.float32),
            "k_w": _dense(next(keys), HIDDEN, HIDDEN), "k_b": jnp.zeros((HIDDEN,), jnp.float32),
            "v_w": _dense(next(keys), HIDDEN, HIDDEN), "v_b": jnp.zeros((HIDDEN,), jnp.float32),
            "o_w": _dense(next(keys), HIDDEN, HIDDEN), "o_b": jnp.zeros((HIDDEN,), jnp.float32),
            "ln1_g": jnp.ones((HIDDEN,), jnp.float32), "ln1_b": jnp.zeros((HIDDEN,), jnp.float32),
            "i_w": _dense(next(keys), HIDDEN, INTERMEDIATE), "i_b": jnp.zeros((INTERMEDIATE,), jnp.float32),
            "fo_w": _dense(next(keys), INTERMEDIATE, HIDDEN), "fo_b": jnp.zeros((HIDDEN,), jnp.float32),
            "ln2_g": jnp.ones((HIDDEN,), jnp.float32), "ln2_b": jnp.zeros((HIDDEN,), jnp.float32),
        })
    return p


# ---------------- one-time parameter packing (heads split, bf16 MXU operands) ----------------

def pack_params(params):
    H, NH, Dh = HIDDEN, NUM_HEADS, HEAD_DIM
    L = params["layers"]

    def w_heads(w):   # (H, H): output columns are concatenated heads -> (NH, H, Dh)
        return w.reshape(H, NH, Dh).transpose(1, 0, 2)

    def b_heads(b):   # (H,) -> (NH, 1, Dh)
        return b.reshape(NH, 1, Dh)

    wqkv = jnp.stack([jnp.concatenate([w_heads(l["q_w"]), w_heads(l["k_w"]), w_heads(l["v_w"])], 0)
                      for l in L]).astype(jnp.bfloat16)                         # (NL, 3NH, H, Dh)
    bqkv = jnp.stack([jnp.concatenate([b_heads(l["q_b"]), b_heads(l["k_b"]), b_heads(l["v_b"])], 0)
                      for l in L])                                              # (NL, 3NH, 1, Dh)
    return {
        "word_emb": params["word_emb"], "pos_emb": params["pos_emb"], "type_emb": params["type_emb"],
        "emb_g": params["emb_ln_g"][None, :], "emb_b": params["emb_ln_b"][None, :],
        "wqkv": wqkv, "bqkv": bqkv,
        # output projection: input rows are concatenated heads -> per-head slabs (NH, Dh, H)
        "wo": jnp.stack([l["o_w"].reshape(NH, Dh, H) for l in L]).astype(jnp.bfloat16),
        "bo": jnp.stack([l["o_b"][None, :] for l in L]),
        "ln1g": jnp.stack([l["ln1_g"][None, :] for l in L]),
        "ln1b": jnp.stack([l["ln1_b"][None, :] for l in L]),
        "wi": jnp.stack([l["i_w"] for l in L]).astype(jnp.bfloat16),
        "bi": jnp.stack([l["i_b"][None, :] for l in L]),
        "wfo": jnp.stack([l["fo_w"] for l in L]).astype(jnp.bfloat16),
        "bfo": jnp.stack([l["fo_b"][None, :] for l in L]),
        "ln2g": jnp.stack([l["ln2_g"][None, :] for l in L]),
        "ln2b": jnp.stack([l["ln2_b"][None, :] for l in L]),
        "pool_w": params["pool_w"].astype(jnp.bfloat16), "pool_b": params["pool_b"][None, :],
        "fc_w": params["fc_w"].astype(jnp.bfloat16), "fc_b": params["fc_b"][None, :],
    }


# ---------------- forward: embedding glue + ONE fused pallas_call over grid=(B,) ----------------

def bert_classifier_forward(packed, input_ids, attention_mask):
    B, S = input_ids.shape
    H = HIDDEN

    # embeddings (table gather kept as XLA glue; token_type_ids == 0)
    # TODO(synk): token-id gather could move in-kernel via PrefetchScalarGridSpec scalar prefetch.
    emb = (packed["word_emb"][input_ids]
           + packed["pos_emb"][None, :S, :]
           + packed["type_emb"][0][None, None, :]).astype(jnp.float32)          # (B, S, H)
    neg_mask = ((1.0 - attention_mask.astype(jnp.float32)) * -1e9)[:, None, :]  # (B, 1, S)

    args = (emb, neg_mask,
            packed["emb_g"], packed["emb_b"],
            packed["wqkv"], packed["bqkv"], packed["wo"], packed["bo"],
            packed["ln1g"], packed["ln1b"], packed["wi"], packed["bi"],
            packed["wfo"], packed["bfo"], packed["ln2g"], packed["ln2b"],
            packed["pool_w"], packed["pool_b"], packed["fc_w"], packed["fc_b"])

    def _fixed(a):  # weight arrays: same (full) block every grid step -> fetched once
        nd = a.ndim
        return pl.BlockSpec(a.shape, lambda b, _nd=nd: (0,) * _nd)

    in_specs = [pl.BlockSpec((1, S, H), lambda b: (b, 0, 0)),      # per-batch embeddings
                pl.BlockSpec((1, 1, S), lambda b: (b, 0, 0))]      # per-batch additive mask
    in_specs += [_fixed(a) for a in args[2:]]

    out = pl.pallas_call(
        _bert_fused_kernel,
        out_shape=jax.ShapeDtypeStruct((B, 1, NUM_CLASSES), jnp.float32),
        grid=(B,),
        in_specs=in_specs,
        out_specs=pl.BlockSpec((1, 1, NUM_CLASSES), lambda b: (b, 0, 0)),
        compiler_params=pltpu.CompilerParams(dimension_semantics=("parallel",)),
    )(*args)
    return out.reshape(B, NUM_CLASSES)


if __name__ == "__main__":
    key = jax.random.PRNGKey(0)
    pkey, dkey = jax.random.split(key)
    params = init_params(pkey)
    packed = pack_params(params)          # one-time repack: stacked / head-split / bf16 weights

    B, S = 2, 8
    input_ids = jax.random.randint(dkey, (B, S), 0, VOCAB, dtype=jnp.int32)
    attention_mask = jnp.array([[1, 1, 1, 1, 1, 1, 1, 1],
                                [1, 1, 1, 1, 1, 1, 0, 0]], dtype=jnp.int32)

    fwd = jax.jit(bert_classifier_forward)
    logits = jax.block_until_ready(fwd(packed, input_ids, attention_mask))
    assert logits.shape == (B, NUM_CLASSES) and logits.dtype == jnp.float32
    print("KERNEL_OK")
</pallas_src>

<mosaic_0001>
module attributes {stable_mosaic.version = 11 : i64} {
  func.func @_bert_fused_kernel(%arg0: i32, %arg1: memref<1x8x32xf32, #tpu.memory_space<vmem>>, %arg2: memref<1x1x8xf32, #tpu.memory_space<vmem>>, %arg3: memref<1x32xf32, #tpu.memory_space<vmem>>, %arg4: memref<1x32xf32, #tpu.memory_space<vmem>>, %arg5: memref<2x6x32x16xbf16, #tpu.memory_space<vmem>>, %arg6: memref<2x6x1x16xf32, #tpu.memory_space<vmem>>, %arg7: memref<2x2x16x32xbf16, #tpu.memory_space<vmem>>, %arg8: memref<2x1x32xf32, #tpu.memory_space<vmem>>, %arg9: memref<2x1x32xf32, #tpu.memory_space<vmem>>, %arg10: memref<2x1x32xf32, #tpu.memory_space<vmem>>, %arg11: memref<2x32x64xbf16, #tpu.memory_space<vmem>>, %arg12: memref<2x1x64xf32, #tpu.memory_space<vmem>>, %arg13: memref<2x64x32xbf16, #tpu.memory_space<vmem>>, %arg14: memref<2x1x32xf32, #tpu.memory_space<vmem>>, %arg15: memref<2x1x32xf32, #tpu.memory_space<vmem>>, %arg16: memref<2x1x32xf32, #tpu.memory_space<vmem>>, %arg17: memref<32x32xbf16, #tpu.memory_space<vmem>>, %arg18: memref<1x32xf32, #tpu.memory_space<vmem>>, %arg19: memref<32x3xbf16, #tpu.memory_space<vmem>>, %arg20: memref<1x3xf32, #tpu.memory_space<vmem>>, %arg21: memref<1x1x3xf32, #tpu.memory_space<vmem>>) attributes {dimension_semantics = [#tpu.dimension_semantics<parallel>], iteration_bounds = array<i64: 2>, scalar_prefetch = 0 : i64, scratch_operands = 0 : i64, tpu.core_type = #tpu.core_type<tc>, window_params = [{transform_indices = @transform_0, window_bounds = array<i64: 1, 8, 32>}, {transform_indices = @transform_1, window_bounds = array<i64: 1, 1, 8>}, {pipeline_mode = #tpu.pipeline_mode<synchronous>, transform_indices = @transform_2, window_bounds = array<i64: 1, 32>}, {pipeline_mode = #tpu.pipeline_mode<synchronous>, transform_indices = @transform_3, window_bounds = array<i64: 1, 32>}, {pipeline_mode = #tpu.pipeline_mode<synchronous>, transform_indices = @transform_4, window_bounds = array<i64: 2, 6, 32, 16>}, {pipeline_mode = #tpu.pipeline_mode<synchronous>, transform_indices = @transform_5, window_bounds = array<i64: 2, 6, 1, 16>}, {pipeline_mode = #tpu.pipeline_mode<synchronous>, transform_indices = @transform_6, window_bounds = array<i64: 2, 2, 16, 32>}, {pipeline_mode = #tpu.pipeline_mode<synchronous>, transform_indices = @transform_7, window_bounds = array<i64: 2, 1, 32>}, {pipeline_mode = #tpu.pipeline_mode<synchronous>, transform_indices = @transform_8, window_bounds = array<i64: 2, 1, 32>}, {pipeline_mode = #tpu.pipeline_mode<synchronous>, transform_indices = @transform_9, window_bounds = array<i64: 2, 1, 32>}, {pipeline_mode = #tpu.pipeline_mode<synchronous>, transform_indices = @transform_10, window_bounds = array<i64: 2, 32, 64>}, {pipeline_mode = #tpu.pipeline_mode<synchronous>, transform_indices = @transform_11, window_bounds = array<i64: 2, 1, 64>}, {pipeline_mode = #tpu.pipeline_mode<synchronous>, transform_indices = @transform_12, window_bounds = array<i64: 2, 64, 32>}, {pipeline_mode = #tpu.pipeline_mode<synchronous>, transform_indices = @transform_13, window_bounds = array<i64: 2, 1, 32>}, {pipeline_mode = #tpu.pipeline_mode<synchronous>, transform_indices = @transform_14, window_bounds = array<i64: 2, 1, 32>}, {pipeline_mode = #tpu.pipeline_mode<synchronous>, transform_indices = @transform_15, window_bounds = array<i64: 2, 1, 32>}, {pipeline_mode = #tpu.pipeline_mode<synchronous>, transform_indices = @transform_16, window_bounds = array<i64: 32, 32>}, {pipeline_mode = #tpu.pipeline_mode<synchronous>, transform_indices = @transform_17, window_bounds = array<i64: 1, 32>}, {pipeline_mode = #tpu.pipeline_mode<synchronous>, transform_indices = @transform_18, window_bounds = array<i64: 32, 3>}, {pipeline_mode = #tpu.pipeline_mode<synchronous>, transform_indices = @transform_19, window_bounds = array<i64: 1, 3>}, {transform_indices = @transform_20, window_bounds = array<i64: 1, 1, 3>}]} {
    %c0 = arith.constant 0 : index
    %c0_0 = arith.constant 0 : index
    %c0_1 = arith.constant 0 : index
    %0 = vector.load %arg1[%c0, %c0_0, %c0_1] : memref<1x8x32xf32, #tpu.memory_space<vmem>>, vector<1x8x32xf32>
    %1 = vector.shape_cast %0 : vector<1x8x32xf32> to vector<8x32xf32>
    %c0_2 = arith.constant 0 : index
    %c0_3 = arith.constant 0 : index
    %2 = vector.load %arg3[%c0_2, %c0_3] : memref<1x32xf32, #tpu.memory_space<vmem>>, vector<1x32xf32>
    %c0_4 = arith.constant 0 : index
    %c0_5 = arith.constant 0 : index
    %3 = vector.load %arg4[%c0_4, %c0_5] : memref<1x32xf32, #tpu.memory_space<vmem>>, vector<1x32xf32>
    %cst = arith.constant dense<0.000000e+00> : vector<8xf32>
    %4 = vector.multi_reduction <add>, %1, %cst [1] : vector<8x32xf32> to vector<8xf32>
    %5 = vector.shape_cast %4 : vector<8xf32> to vector<8x1xf32>
    %cst_6 = arith.constant 3.200000e+01 : f32
    %6 = vector.broadcast %cst_6 : f32 to vector<8x1xf32>
    %7 = arith.divf %5, %6 : vector<8x1xf32>
    %8 = vector.broadcast %7 : vector<8x1xf32> to vector<8x32xf32>
    %9 = arith.subf %1, %8 : vector<8x32xf32>
    %10 = arith.mulf %9, %9 : vector<8x32xf32>
    %cst_7 = arith.constant dense<0.000000e+00> : vector<8xf32>
    %11 = vector.multi_reduction <add>, %10, %cst_7 [1] : vector<8x32xf32> to vector<8xf32>
    %12 = vector.shape_cast %11 : vector<8xf32> to vector<8x1xf32>
    %cst_8 = arith.constant 3.200000e+01 : f32
    %13 = vector.broadcast %cst_8 : f32 to vector<8x1xf32>
    %14 = arith.divf %12, %13 : vector<8x1xf32>
    %15 = vector.broadcast %7 : vector<8x1xf32> to vector<8x32xf32>
    %16 = arith.subf %1, %15 : vector<8x32xf32>
    %cst_9 = arith.constant 9.99999996E-13 : f32
    %17 = vector.broadcast %cst_9 : f32 to vector<8x1xf32>
    %18 = arith.addf %14, %17 : vector<8x1xf32>
    %19 = math.rsqrt %18 : vector<8x1xf32>
    %20 = vector.broadcast %19 : vector<8x1xf32> to vector<8x32xf32>
    %21 = arith.mulf %16, %20 : vector<8x32xf32>
    %22 = vector.broadcast %2 : vector<1x32xf32> to vector<8x32xf32>
    %23 = arith.mulf %21, %22 : vector<8x32xf32>
    %24 = vector.broadcast %3 : vector<1x32xf32> to vector<8x32xf32>
    %25 = arith.addf %23, %24 : vector<8x32xf32>
    %c0_10 = arith.constant 0 : index
    %c0_11 = arith.constant 0 : index
    %c0_12 = arith.constant 0 : index
    %26 = vector.load %arg2[%c0_10, %c0_11, %c0_12] : memref<1x1x8xf32, #tpu.memory_space<vmem>>, vector<1x1x8xf32>
    %27 = vector.shape_cast %26 : vector<1x1x8xf32> to vector<1x8xf32>
    %28 = arith.truncf %25 : vector<8x32xf32> to vector<8x32xbf16>
    %29 = vector.shape_cast %28 : vector<8x32xbf16> to vector<1x8x32xbf16>
    %30 = vector.shape_cast %29 : vector<1x8x32xbf16> to vector<1x8x32xbf16>
    %31 = vector.broadcast %30 : vector<1x8x32xbf16> to vector<6x8x32xbf16>
    %c0_13 = arith.constant 0 : index
    %c0_14 = arith.constant 0 : index
    %c0_15 = arith.constant 0 : index
    %c0_16 = arith.constant 0 : index
    %32 = vector.load %arg5[%c0_13, %c0_14, %c0_15, %c0_16] : memref<2x6x32x16xbf16, #tpu.memory_space<vmem>>, vector<1x6x32x16xbf16>
    %33 = vector.shape_cast %32 : vector<1x6x32x16xbf16> to vector<6x32x16xbf16>
    %cst_17 = arith.constant dense<0.000000e+00> : vector<6x8x16xf32>
    %34 = tpu.matmul %31, %33, %cst_17 {dimension_numbers = #tpu.dot_dimension_numbers<[2], [1], [1], [2], [0, 0, 0, 1, 1, 2], [0], [0]>} : vector<6x8x32xbf16>, vector<6x32x16xbf16>, vector<6x8x16xf32> -> vector<6x8x16xf32>
    %c0_18 = arith.constant 0 : index
    %c0_19 = arith.constant 0 : index
    %c0_20 = arith.constant 0 : index
    %c0_21 = arith.constant 0 : index
    %35 = vector.load %arg6[%c0_18, %c0_19, %c0_20, %c0_21] : memref<2x6x1x16xf32, #tpu.memory_space<vmem>>, vector<1x6x1x16xf32>
    %36 = vector.shape_cast %35 : vector<1x6x1x16xf32> to vector<6x1x16xf32>
    %37 = vector.broadcast %36 : vector<6x1x16xf32> to vector<6x8x16xf32>
    %38 = arith.addf %34, %37 : vector<6x8x16xf32>
    %39 = vector.extract_strided_slice %38 {offsets = [0, 0, 0], sizes = [2, 8, 16], strides = [1, 1, 1]} : vector<6x8x16xf32> to vector<2x8x16xf32>
    %40 = vector.extract_strided_slice %38 {offsets = [2, 0, 0], sizes = [2, 8, 16], strides = [1, 1, 1]} : vector<6x8x16xf32> to vector<2x8x16xf32>
    %41 = vector.extract_strided_slice %38 {offsets = [4, 0, 0], sizes = [2, 8, 16], strides = [1, 1, 1]} : vector<6x8x16xf32> to vector<2x8x16xf32>
    %42 = arith.truncf %39 : vector<2x8x16xf32> to vector<2x8x16xbf16>
    %43 = arith.truncf %40 : vector<2x8x16xf32> to vector<2x8x16xbf16>
    %cst_22 = arith.constant dense<0.000000e+00> : vector<2x8x8xf32>
    %44 = tpu.matmul %42, %43, %cst_22 {dimension_numbers = #tpu.dot_dimension_numbers<[2], [2], [1], [1], [0, 0, 0, 1, 1, 1], [0], [0]>} : vector<2x8x16xbf16>, vector<2x8x16xbf16>, vector<2x8x8xf32> -> vector<2x8x8xf32>
    %cst_23 = arith.constant 2.500000e-01 : f32
    %45 = vector.broadcast %cst_23 : f32 to vector<2x8x8xf32>
    %46 = arith.mulf %44, %45 : vector<2x8x8xf32>
    %47 = vector.shape_cast %27 : vector<1x8xf32> to vector<1x1x8xf32>
    %48 = vector.broadcast %47 : vector<1x1x8xf32> to vector<2x8x8xf32>
    %49 = arith.addf %46, %48 : vector<2x8x8xf32>
    %cst_24 = arith.constant dense<0xFF800000> : vector<2x8xf32>
    %50 = vector.multi_reduction <maximumf>, %49, %cst_24 [2] : vector<2x8x8xf32> to vector<2x8xf32>
    %51 = vector.shape_cast %50 : vector<2x8xf32> to vector<2x8x1xf32>
    %52 = vector.broadcast %51 : vector<2x8x1xf32> to vector<2x8x8xf32>
    %53 = arith.subf %49, %52 : vector<2x8x8xf32>
    %54 = math.exp %53 : vector<2x8x8xf32>
    %cst_25 = arith.constant dense<0.000000e+00> : vector<2x8xf32>
    %55 = vector.multi_reduction <add>, %54, %cst_25 [2] : vector<2x8x8xf32> to vector<2x8xf32>
    %56 = vector.shape_cast %55 : vector<2x8xf32> to vector<2x8x1xf32>
    %57 = tpu.reciprocal %56 {approx = true} : vector<2x8x1xf32> -> vector<2x8x1xf32>
    %58 = vector.broadcast %57 : vector<2x8x1xf32> to vector<2x8x8xf32>
    %59 = arith.mulf %54, %58 : vector<2x8x8xf32>
    %60 = arith.truncf %59 : vector<2x8x8xf32> to vector<2x8x8xbf16>
    %61 = arith.truncf %41 : vector<2x8x16xf32> to vector<2x8x16xbf16>
    %cst_26 = arith.constant dense<0.000000e+00> : vector<2x8x16xf32>
    %62 = tpu.matmul %60, %61, %cst_26 {dimension_numbers = #tpu.dot_dimension_numbers<[2], [1], [1], [2], [0, 0, 0, 1, 1, 2], [0], [0]>} : vector<2x8x8xbf16>, vector<2x8x16xbf16>, vector<2x8x16xf32> -> vector<2x8x16xf32>
    %63 = arith.truncf %62 : vector<2x8x16xf32> to vector<2x8x16xbf16>
    %c0_27 = arith.constant 0 : index
    %c0_28 = arith.constant 0 : index
    %c0_29 = arith.constant 0 : index
    %c0_30 = arith.constant 0 : index
    %64 = vector.load %arg7[%c0_27, %c0_28, %c0_29, %c0_30] : memref<2x2x16x32xbf16, #tpu.memory_space<vmem>>, vector<1x2x16x32xbf16>
    %65 = vector.shape_cast %64 : vector<1x2x16x32xbf16> to vector<2x16x32xbf16>
    %cst_31 = arith.constant dense<0.000000e+00> : vector<2x8x32xf32>
    %66 = tpu.matmul %63, %65, %cst_31 {dimension_numbers = #tpu.dot_dimension_numbers<[2], [1], [1], [2], [0, 0, 0, 1, 1, 2], [0], [0]>} : vector<2x8x16xbf16>, vector<2x16x32xbf16>, vector<2x8x32xf32> -> vector<2x8x32xf32>
    %cst_32 = arith.constant dense<0.000000e+00> : vector<8x32xf32>
    %67 = vector.multi_reduction <add>, %66, %cst_32 [0] : vector<2x8x32xf32> to vector<8x32xf32>
    %c0_33 = arith.constant 0 : index
    %c0_34 = arith.constant 0 : index
    %c0_35 = arith.constant 0 : index
    %68 = vector.load %arg8[%c0_33, %c0_34, %c0_35] : memref<2x1x32xf32, #tpu.memory_space<vmem>>, vector<1x1x32xf32>
    %69 = vector.shape_cast %68 : vector<1x1x32xf32> to vector<1x32xf32>
    %70 = vector.broadcast %69 : vector<1x32xf32> to vector<8x32xf32>
    %71 = arith.addf %67, %70 : vector<8x32xf32>
    %72 = arith.addf %71, %25 : vector<8x32xf32>
    %c0_36 = arith.constant 0 : index
    %c0_37 = arith.constant 0 : index
    %c0_38 = arith.constant 0 : index
    %73 = vector.load %arg9[%c0_36, %c0_37, %c0_38] : memref<2x1x32xf32, #tpu.memory_space<vmem>>, vector<1x1x32xf32>
    %74 = vector.shape_cast %73 : vector<1x1x32xf32> to vector<1x32xf32>
    %c0_39 = arith.constant 0 : index
    %c0_40 = arith.constant 0 : index
    %c0_41 = arith.constant 0 : index
    %75 = vector.load %arg10[%c0_39, %c0_40, %c0_41] : memref<2x1x32xf32, #tpu.memory_space<vmem>>, vector<1x1x32xf32>
    %76 = vector.shape_cast %75 : vector<1x1x32xf32> to vector<1x32xf32>
    %cst_42 = arith.constant dense<0.000000e+00> : vector<8xf32>
    %77 = vector.multi_reduction <add>, %72, %cst_42 [1] : vector<8x32xf32> to vector<8xf32>
    %78 = vector.shape_cast %77 : vector<8xf32> to vector<8x1xf32>
    %cst_43 = arith.constant 3.200000e+01 : f32
    %79 = vector.broadcast %cst_43 : f32 to vector<8x1xf32>
    %80 = arith.divf %78, %79 : vector<8x1xf32>
    %81 = vector.broadcast %80 : vector<8x1xf32> to vector<8x32xf32>
    %82 = arith.subf %72, %81 : vector<8x32xf32>
    %83 = arith.mulf %82, %82 : vector<8x32xf32>
    %cst_44 = arith.constant dense<0.000000e+00> : vector<8xf32>
    %84 = vector.multi_reduction <add>, %83, %cst_44 [1] : vector<8x32xf32> to vector<8xf32>
    %85 = vector.shape_cast %84 : vector<8xf32> to vector<8x1xf32>
    %cst_45 = arith.constant 3.200000e+01 : f32
    %86 = vector.broadcast %cst_45 : f32 to vector<8x1xf32>
    %87 = arith.divf %85, %86 : vector<8x1xf32>
    %88 = vector.broadcast %80 : vector<8x1xf32> to vector<8x32xf32>
    %89 = arith.subf %72, %88 : vector<8x32xf32>
    %cst_46 = arith.constant 9.99999996E-13 : f32
    %90 = vector.broadcast %cst_46 : f32 to vector<8x1xf32>
    %91 = arith.addf %87, %90 : vector<8x1xf32>
    %92 = math.rsqrt %91 : vector<8x1xf32>
    %93 = vector.broadcast %92 : vector<8x1xf32> to vector<8x32xf32>
    %94 = arith.mulf %89, %93 : vector<8x32xf32>
    %95 = vector.broadcast %74 : vector<1x32xf32> to vector<8x32xf32>
    %96 = arith.mulf %94, %95 : vector<8x32xf32>
    %97 = vector.broadcast %76 : vector<1x32xf32> to vector<8x32xf32>
    %98 = arith.addf %96, %97 : vector<8x32xf32>
    %99 = arith.truncf %98 : vector<8x32xf32> to vector<8x32xbf16>
    %c0_47 = arith.constant 0 : index
    %c0_48 = arith.constant 0 : index
    %c0_49 = arith.constant 0 : index
    %100 = vector.load %arg11[%c0_47, %c0_48, %c0_49] : memref<2x32x64xbf16, #tpu.memory_space<vmem>>, vector<1x32x64xbf16>
    %101 = vector.shape_cast %100 : vector<1x32x64xbf16> to vector<32x64xbf16>
    %cst_50 = arith.constant dense<0.000000e+00> : vector<8x64xf32>
    %102 = tpu.matmul %99, %101, %cst_50 {dimension_numbers = #tpu.dot_dimension_numbers<[1], [0], [0], [1], [0, 0, 1, 1], [], []>} : vector<8x32xbf16>, vector<32x64xbf16>, vector<8x64xf32> -> vector<8x64xf32>
    %c0_51 = arith.constant 0 : index
    %c0_52 = arith.constant 0 : index
    %c0_53 = arith.constant 0 : index
    %103 = vector.load %arg12[%c0_51, %c0_52, %c0_53] : memref<2x1x64xf32, #tpu.memory_space<vmem>>, vector<1x1x64xf32>
    %104 = vector.shape_cast %103 : vector<1x1x64xf32> to vector<1x64xf32>
    %105 = vector.broadcast %104 : vector<1x64xf32> to vector<8x64xf32>
    %106 = arith.addf %102, %105 : vector<8x64xf32>
    %cst_54 = arith.constant 5.000000e-01 : f32
    %107 = vector.broadcast %cst_54 : f32 to vector<8x64xf32>
    %108 = arith.mulf %107, %106 : vector<8x64xf32>
    %cst_55 = arith.constant 4.471500e-02 : f32
    %109 = vector.broadcast %cst_55 : f32 to vector<8x64xf32>
    %110 = arith.mulf %109, %106 : vector<8x64xf32>
    %111 = arith.mulf %110, %106 : vector<8x64xf32>
    %112 = arith.mulf %111, %106 : vector<8x64xf32>
    %113 = arith.addf %106, %112 : vector<8x64xf32>
    %cst_56 = arith.constant 0.797884583 : f32
    %114 = vector.broadcast %cst_56 : f32 to vector<8x64xf32>
    %115 = arith.mulf %114, %113 : vector<8x64xf32>
    %116 = math.tanh %115 : vector<8x64xf32>
    %cst_57 = arith.constant 1.000000e+00 : f32
    %117 = vector.broadcast %cst_57 : f32 to vector<8x64xf32>
    %118 = arith.addf %117, %116 : vector<8x64xf32>
    %119 = arith.mulf %108, %118 : vector<8x64xf32>
    %120 = arith.truncf %119 : vector<8x64xf32> to vector<8x64xbf16>
    %c0_58 = arith.constant 0 : index
    %c0_59 = arith.constant 0 : index
    %c0_60 = arith.constant 0 : index
    %121 = vector.load %arg13[%c0_58, %c0_59, %c0_60] : memref<2x64x32xbf16, #tpu.memory_space<vmem>>, vector<1x64x32xbf16>
    %122 = vector.shape_cast %121 : vector<1x64x32xbf16> to vector<64x32xbf16>
    %cst_61 = arith.constant dense<0.000000e+00> : vector<8x32xf32>
    %123 = tpu.matmul %120, %122, %cst_61 {dimension_numbers = #tpu.dot_dimension_numbers<[1], [0], [0], [1], [0, 0, 1, 1], [], []>} : vector<8x64xbf16>, vector<64x32xbf16>, vector<8x32xf32> -> vector<8x32xf32>
    %c0_62 = arith.constant 0 : index
    %c0_63 = arith.constant 0 : index
    %c0_64 = arith.constant 0 : index
    %124 = vector.load %arg14[%c0_62, %c0_63, %c0_64] : memref<2x1x32xf32, #tpu.memory_space<vmem>>, vector<1x1x32xf32>
    %125 = vector.shape_cast %124 : vector<1x1x32xf32> to vector<1x32xf32>
    %126 = vector.broadcast %125 : vector<1x32xf32> to vector<8x32xf32>
    %127 = arith.addf %123, %126 : vector<8x32xf32>
    %128 = arith.addf %127, %98 : vector<8x32xf32>
    %c0_65 = arith.constant 0 : index
    %c0_66 = arith.constant 0 : index
    %c0_67 = arith.constant 0 : index
    %129 = vector.load %arg15[%c0_65, %c0_66, %c0_67] : memref<2x1x32xf32, #tpu.memory_space<vmem>>, vector<1x1x32xf32>
    %130 = vector.shape_cast %129 : vector<1x1x32xf32> to vector<1x32xf32>
    %c0_68 = arith.constant 0 : index
    %c0_69 = arith.constant 0 : index
    %c0_70 = arith.constant 0 : index
    %131 = vector.load %arg16[%c0_68, %c0_69, %c0_70] : memref<2x1x32xf32, #tpu.memory_space<vmem>>, vector<1x1x32xf32>
    %132 = vector.shape_cast %131 : vector<1x1x32xf32> to vector<1x32xf32>
    %cst_71 = arith.constant dense<0.000000e+00> : vector<8xf32>
    %133 = vector.multi_reduction <add>, %128, %cst_71 [1] : vector<8x32xf32> to vector<8xf32>
    %134 = vector.shape_cast %133 : vector<8xf32> to vector<8x1xf32>
    %cst_72 = arith.constant 3.200000e+01 : f32
    %135 = vector.broadcast %cst_72 : f32 to vector<8x1xf32>
    %136 = arith.divf %134, %135 : vector<8x1xf32>
    %137 = vector.broadcast %136 : vector<8x1xf32> to vector<8x32xf32>
    %138 = arith.subf %128, %137 : vector<8x32xf32>
    %139 = arith.mulf %138, %138 : vector<8x32xf32>
    %cst_73 = arith.constant dense<0.000000e+00> : vector<8xf32>
    %140 = vector.multi_reduction <add>, %139, %cst_73 [1] : vector<8x32xf32> to vector<8xf32>
    %141 = vector.shape_cast %140 : vector<8xf32> to vector<8x1xf32>
    %cst_74 = arith.constant 3.200000e+01 : f32
    %142 = vector.broadcast %cst_74 : f32 to vector<8x1xf32>
    %143 = arith.divf %141, %142 : vector<8x1xf32>
    %144 = vector.broadcast %136 : vector<8x1xf32> to vector<8x32xf32>
    %145 = arith.subf %128, %144 : vector<8x32xf32>
    %cst_75 = arith.constant 9.99999996E-13 : f32
    %146 = vector.broadcast %cst_75 : f32 to vector<8x1xf32>
    %147 = arith.addf %143, %146 : vector<8x1xf32>
    %148 = math.rsqrt %147 : vector<8x1xf32>
    %149 = vector.broadcast %148 : vector<8x1xf32> to vector<8x32xf32>
    %150 = arith.mulf %145, %149 : vector<8x32xf32>
    %151 = vector.broadcast %130 : vector<1x32xf32> to vector<8x32xf32>
    %152 = arith.mulf %150, %151 : vector<8x32xf32>
    %153 = vector.broadcast %132 : vector<1x32xf32> to vector<8x32xf32>
    %154 = arith.addf %152, %153 : vector<8x32xf32>
    %155 = arith.truncf %154 : vector<8x32xf32> to vector<8x32xbf16>
    %156 = vector.shape_cast %155 : vector<8x32xbf16> to vector<1x8x32xbf16>
    %157 = vector.shape_cast %156 : vector<1x8x32xbf16> to vector<1x8x32xbf16>
    %158 = vector.broadcast %157 : vector<1x8x32xbf16> to vector<6x8x32xbf16>
    %c1 = arith.constant 1 : index
    %c0_76 = arith.constant 0 : index
    %c0_77 = arith.constant 0 : index
    %c0_78 = arith.constant 0 : index
    %159 = vector.load %arg5[%c1, %c0_76, %c0_77, %c0_78] : memref<2x6x32x16xbf16, #tpu.memory_space<vmem>>, vector<1x6x32x16xbf16>
    %160 = vector.shape_cast %159 : vector<1x6x32x16xbf16> to vector<6x32x16xbf16>
    %cst_79 = arith.constant dense<0.000000e+00> : vector<6x8x16xf32>
    %161 = tpu.matmul %158, %160, %cst_79 {dimension_numbers = #tpu.dot_dimension_numbers<[2], [1], [1], [2], [0, 0, 0, 1, 1, 2], [0], [0]>} : vector<6x8x32xbf16>, vector<6x32x16xbf16>, vector<6x8x16xf32> -> vector<6x8x16xf32>
    %c1_80 = arith.constant 1 : index
    %c0_81 = arith.constant 0 : index
    %c0_82 = arith.constant 0 : index
    %c0_83 = arith.constant 0 : index
    %162 = vector.load %arg6[%c1_80, %c0_81, %c0_82, %c0_83] : memref<2x6x1x16xf32, #tpu.memory_space<vmem>>, vector<1x6x1x16xf32>
    %163 = vector.shape_cast %162 : vector<1x6x1x16xf32> to vector<6x1x16xf32>
    %164 = vector.broadcast %163 : vector<6x1x16xf32> to vector<6x8x16xf32>
    %165 = arith.addf %161, %164 : vector<6x8x16xf32>
    %166 = vector.extract_strided_slice %165 {offsets = [0, 0, 0], sizes = [2, 8, 16], strides = [1, 1, 1]} : vector<6x8x16xf32> to vector<2x8x16xf32>
    %167 = vector.extract_strided_slice %165 {offsets = [2, 0, 0], sizes = [2, 8, 16], strides = [1, 1, 1]} : vector<6x8x16xf32> to vector<2x8x16xf32>
    %168 = vector.extract_strided_slice %165 {offsets = [4, 0, 0], sizes = [2, 8, 16], strides = [1, 1, 1]} : vector<6x8x16xf32> to vector<2x8x16xf32>
    %169 = arith.truncf %166 : vector<2x8x16xf32> to vector<2x8x16xbf16>
    %170 = arith.truncf %167 : vector<2x8x16xf32> to vector<2x8x16xbf16>
    %cst_84 = arith.constant dense<0.000000e+00> : vector<2x8x8xf32>
    %171 = tpu.matmul %169, %170, %cst_84 {dimension_numbers = #tpu.dot_dimension_numbers<[2], [2], [1], [1], [0, 0, 0, 1, 1, 1], [0], [0]>} : vector<2x8x16xbf16>, vector<2x8x16xbf16>, vector<2x8x8xf32> -> vector<2x8x8xf32>
    %cst_85 = arith.constant 2.500000e-01 : f32
    %172 = vector.broadcast %cst_85 : f32 to vector<2x8x8xf32>
    %173 = arith.mulf %171, %172 : vector<2x8x8xf32>
    %174 = vector.shape_cast %27 : vector<1x8xf32> to vector<1x1x8xf32>
    %175 = vector.broadcast %174 : vector<1x1x8xf32> to vector<2x8x8xf32>
    %176 = arith.addf %173, %175 : vector<2x8x8xf32>
    %cst_86 = arith.constant dense<0xFF800000> : vector<2x8xf32>
    %177 = vector.multi_reduction <maximumf>, %176, %cst_86 [2] : vector<2x8x8xf32> to vector<2x8xf32>
    %178 = vector.shape_cast %177 : vector<2x8xf32> to vector<2x8x1xf32>
    %179 = vector.broadcast %178 : vector<2x8x1xf32> to vector<2x8x8xf32>
    %180 = arith.subf %176, %179 : vector<2x8x8xf32>
    %181 = math.exp %180 : vector<2x8x8xf32>
    %cst_87 = arith.constant dense<0.000000e+00> : vector<2x8xf32>
    %182 = vector.multi_reduction <add>, %181, %cst_87 [2] : vector<2x8x8xf32> to vector<2x8xf32>
    %183 = vector.shape_cast %182 : vector<2x8xf32> to vector<2x8x1xf32>
    %184 = tpu.reciprocal %183 {approx = true} : vector<2x8x1xf32> -> vector<2x8x1xf32>
    %185 = vector.broadcast %184 : vector<2x8x1xf32> to vector<2x8x8xf32>
    %186 = arith.mulf %181, %185 : vector<2x8x8xf32>
    %187 = arith.truncf %186 : vector<2x8x8xf32> to vector<2x8x8xbf16>
    %188 = arith.truncf %168 : vector<2x8x16xf32> to vector<2x8x16xbf16>
    %cst_88 = arith.constant dense<0.000000e+00> : vector<2x8x16xf32>
    %189 = tpu.matmul %187, %188, %cst_88 {dimension_numbers = #tpu.dot_dimension_numbers<[2], [1], [1], [2], [0, 0, 0, 1, 1, 2], [0], [0]>} : vector<2x8x8xbf16>, vector<2x8x16xbf16>, vector<2x8x16xf32> -> vector<2x8x16xf32>
    %190 = arith.truncf %189 : vector<2x8x16xf32> to vector<2x8x16xbf16>
    %c1_89 = arith.constant 1 : index
    %c0_90 = arith.constant 0 : index
    %c0_91 = arith.constant 0 : index
    %c0_92 = arith.constant 0 : index
    %191 = vector.load %arg7[%c1_89, %c0_90, %c0_91, %c0_92] : memref<2x2x16x32xbf16, #tpu.memory_space<vmem>>, vector<1x2x16x32xbf16>
    %192 = vector.shape_cast %191 : vector<1x2x16x32xbf16> to vector<2x16x32xbf16>
    %cst_93 = arith.constant dense<0.000000e+00> : vector<2x8x32xf32>
    %193 = tpu.matmul %190, %192, %cst_93 {dimension_numbers = #tpu.dot_dimension_numbers<[2], [1], [1], [2], [0, 0, 0, 1, 1, 2], [0], [0]>} : vector<2x8x16xbf16>, vector<2x16x32xbf16>, vector<2x8x32xf32> -> vector<2x8x32xf32>
    %cst_94 = arith.constant dense<0.000000e+00> : vector<8x32xf32>
    %194 = vector.multi_reduction <add>, %193, %cst_94 [0] : vector<2x8x32xf32> to vector<8x32xf32>
    %c1_95 = arith.constant 1 : index
    %c0_96 = arith.constant 0 : index
    %c0_97 = arith.constant 0 : index
    %195 = vector.load %arg8[%c1_95, %c0_96, %c0_97] : memref<2x1x32xf32, #tpu.memory_space<vmem>>, vector<1x1x32xf32>
    %196 = vector.shape_cast %195 : vector<1x1x32xf32> to vector<1x32xf32>
    %197 = vector.broadcast %196 : vector<1x32xf32> to vector<8x32xf32>
    %198 = arith.addf %194, %197 : vector<8x32xf32>
    %199 = arith.addf %198, %154 : vector<8x32xf32>
    %c1_98 = arith.constant 1 : index
    %c0_99 = arith.constant 0 : index
    %c0_100 = arith.constant 0 : index
    %200 = vector.load %arg9[%c1_98, %c0_99, %c0_100] : memref<2x1x32xf32, #tpu.memory_space<vmem>>, vector<1x1x32xf32>
    %201 = vector.shape_cast %200 : vector<1x1x32xf32> to vector<1x32xf32>
    %c1_101 = arith.constant 1 : index
    %c0_102 = arith.constant 0 : index
    %c0_103 = arith.constant 0 : index
    %202 = vector.load %arg10[%c1_101, %c0_102, %c0_103] : memref<2x1x32xf32, #tpu.memory_space<vmem>>, vector<1x1x32xf32>
    %203 = vector.shape_cast %202 : vector<1x1x32xf32> to vector<1x32xf32>
    %cst_104 = arith.constant dense<0.000000e+00> : vector<8xf32>
    %204 = vector.multi_reduction <add>, %199, %cst_104 [1] : vector<8x32xf32> to vector<8xf32>
    %205 = vector.shape_cast %204 : vector<8xf32> to vector<8x1xf32>
    %cst_105 = arith.constant 3.200000e+01 : f32
    %206 = vector.broadcast %cst_105 : f32 to vector<8x1xf32>
    %207 = arith.divf %205, %206 : vector<8x1xf32>
    %208 = vector.broadcast %207 : vector<8x1xf32> to vector<8x32xf32>
    %209 = arith.subf %199, %208 : vector<8x32xf32>
    %210 = arith.mulf %209, %209 : vector<8x32xf32>
    %cst_106 = arith.constant dense<0.000000e+00> : vector<8xf32>
    %211 = vector.multi_reduction <add>, %210, %cst_106 [1] : vector<8x32xf32> to vector<8xf32>
    %212 = vector.shape_cast %211 : vector<8xf32> to vector<8x1xf32>
    %cst_107 = arith.constant 3.200000e+01 : f32
    %213 = vector.broadcast %cst_107 : f32 to vector<8x1xf32>
    %214 = arith.divf %212, %213 : vector<8x1xf32>
    %215 = vector.broadcast %207 : vector<8x1xf32> to vector<8x32xf32>
    %216 = arith.subf %199, %215 : vector<8x32xf32>
    %cst_108 = arith.constant 9.99999996E-13 : f32
    %217 = vector.broadcast %cst_108 : f32 to vector<8x1xf32>
    %218 = arith.addf %214, %217 : vector<8x1xf32>
    %219 = math.rsqrt %218 : vector<8x1xf32>
    %220 = vector.broadcast %219 : vector<8x1xf32> to vector<8x32xf32>
    %221 = arith.mulf %216, %220 : vector<8x32xf32>
    %222 = vector.broadcast %201 : vector<1x32xf32> to vector<8x32xf32>
    %223 = arith.mulf %221, %222 : vector<8x32xf32>
    %224 = vector.broadcast %203 : vector<1x32xf32> to vector<8x32xf32>
    %225 = arith.addf %223, %224 : vector<8x32xf32>
    %226 = arith.truncf %225 : vector<8x32xf32> to vector<8x32xbf16>
    %c1_109 = arith.constant 1 : index
    %c0_110 = arith.constant 0 : index
    %c0_111 = arith.constant 0 : index
    %227 = vector.load %arg11[%c1_109, %c0_110, %c0_111] : memref<2x32x64xbf16, #tpu.memory_space<vmem>>, vector<1x32x64xbf16>
    %228 = vector.shape_cast %227 : vector<1x32x64xbf16> to vector<32x64xbf16>
    %cst_112 = arith.constant dense<0.000000e+00> : vector<8x64xf32>
    %229 = tpu.matmul %226, %228, %cst_112 {dimension_numbers = #tpu.dot_dimension_numbers<[1], [0], [0], [1], [0, 0, 1, 1], [], []>} : vector<8x32xbf16>, vector<32x64xbf16>, vector<8x64xf32> -> vector<8x64xf32>
    %c1_113 = arith.constant 1 : index
    %c0_114 = arith.constant 0 : index
    %c0_115 = arith.constant 0 : index
    %230 = vector.load %arg12[%c1_113, %c0_114, %c0_115] : memref<2x1x64xf32, #tpu.memory_space<vmem>>, vector<1x1x64xf32>
    %231 = vector.shape_cast %230 : vector<1x1x64xf32> to vector<1x64xf32>
    %232 = vector.broadcast %231 : vector<1x64xf32> to vector<8x64xf32>
    %233 = arith.addf %229, %232 : vector<8x64xf32>
    %cst_116 = arith.constant 5.000000e-01 : f32
    %234 = vector.broadcast %cst_116 : f32 to vector<8x64xf32>
    %235 = arith.mulf %234, %233 : vector<8x64xf32>
    %cst_117 = arith.constant 4.471500e-02 : f32
    %236 = vector.broadcast %cst_117 : f32 to vector<8x64xf32>
    %237 = arith.mulf %236, %233 : vector<8x64xf32>
    %238 = arith.mulf %237, %233 : vector<8x64xf32>
    %239 = arith.mulf %238, %233 : vector<8x64xf32>
    %240 = arith.addf %233, %239 : vector<8x64xf32>
    %cst_118 = arith.constant 0.797884583 : f32
    %241 = vector.broadcast %cst_118 : f32 to vector<8x64xf32>
    %242 = arith.mulf %241, %240 : vector<8x64xf32>
    %243 = math.tanh %242 : vector<8x64xf32>
    %cst_119 = arith.constant 1.000000e+00 : f32
    %244 = vector.broadcast %cst_119 : f32 to vector<8x64xf32>
    %245 = arith.addf %244, %243 : vector<8x64xf32>
    %246 = arith.mulf %235, %245 : vector<8x64xf32>
    %247 = arith.truncf %246 : vector<8x64xf32> to vector<8x64xbf16>
    %c1_120 = arith.constant 1 : index
    %c0_121 = arith.constant 0 : index
    %c0_122 = arith.constant 0 : index
    %248 = vector.load %arg13[%c1_120, %c0_121, %c0_122] : memref<2x64x32xbf16, #tpu.memory_space<vmem>>, vector<1x64x32xbf16>
    %249 = vector.shape_cast %248 : vector<1x64x32xbf16> to vector<64x32xbf16>
    %cst_123 = arith.constant dense<0.000000e+00> : vector<8x32xf32>
    %250 = tpu.matmul %247, %249, %cst_123 {dimension_numbers = #tpu.dot_dimension_numbers<[1], [0], [0], [1], [0, 0, 1, 1], [], []>} : vector<8x64xbf16>, vector<64x32xbf16>, vector<8x32xf32> -> vector<8x32xf32>
    %c1_124 = arith.constant 1 : index
    %c0_125 = arith.constant 0 : index
    %c0_126 = arith.constant 0 : index
    %251 = vector.load %arg14[%c1_124, %c0_125, %c0_126] : memref<2x1x32xf32, #tpu.memory_space<vmem>>, vector<1x1x32xf32>
    %252 = vector.shape_cast %251 : vector<1x1x32xf32> to vector<1x32xf32>
    %253 = vector.broadcast %252 : vector<1x32xf32> to vector<8x32xf32>
    %254 = arith.addf %250, %253 : vector<8x32xf32>
    %255 = arith.addf %254, %225 : vector<8x32xf32>
    %c1_127 = arith.constant 1 : index
    %c0_128 = arith.constant 0 : index
    %c0_129 = arith.constant 0 : index
    %256 = vector.load %arg15[%c1_127, %c0_128, %c0_129] : memref<2x1x32xf32, #tpu.memory_space<vmem>>, vector<1x1x32xf32>
    %257 = vector.shape_cast %256 : vector<1x1x32xf32> to vector<1x32xf32>
    %c1_130 = arith.constant 1 : index
    %c0_131 = arith.constant 0 : index
    %c0_132 = arith.constant 0 : index
    %258 = vector.load %arg16[%c1_130, %c0_131, %c0_132] : memref<2x1x32xf32, #tpu.memory_space<vmem>>, vector<1x1x32xf32>
    %259 = vector.shape_cast %258 : vector<1x1x32xf32> to vector<1x32xf32>
    %cst_133 = arith.constant dense<0.000000e+00> : vector<8xf32>
    %260 = vector.multi_reduction <add>, %255, %cst_133 [1] : vector<8x32xf32> to vector<8xf32>
    %261 = vector.shape_cast %260 : vector<8xf32> to vector<8x1xf32>
    %cst_134 = arith.constant 3.200000e+01 : f32
    %262 = vector.broadcast %cst_134 : f32 to vector<8x1xf32>
    %263 = arith.divf %261, %262 : vector<8x1xf32>
    %264 = vector.broadcast %263 : vector<8x1xf32> to vector<8x32xf32>
    %265 = arith.subf %255, %264 : vector<8x32xf32>
    %266 = arith.mulf %265, %265 : vector<8x32xf32>
    %cst_135 = arith.constant dense<0.000000e+00> : vector<8xf32>
    %267 = vector.multi_reduction <add>, %266, %cst_135 [1] : vector<8x32xf32> to vector<8xf32>
    %268 = vector.shape_cast %267 : vector<8xf32> to vector<8x1xf32>
    %cst_136 = arith.constant 3.200000e+01 : f32
    %269 = vector.broadcast %cst_136 : f32 to vector<8x1xf32>
    %270 = arith.divf %268, %269 : vector<8x1xf32>
    %271 = vector.broadcast %263 : vector<8x1xf32> to vector<8x32xf32>
    %272 = arith.subf %255, %271 : vector<8x32xf32>
    %cst_137 = arith.constant 9.99999996E-13 : f32
    %273 = vector.broadcast %cst_137 : f32 to vector<8x1xf32>
    %274 = arith.addf %270, %273 : vector<8x1xf32>
    %275 = math.rsqrt %274 : vector<8x1xf32>
    %276 = vector.broadcast %275 : vector<8x1xf32> to vector<8x32xf32>
    %277 = arith.mulf %272, %276 : vector<8x32xf32>
    %278 = vector.broadcast %257 : vector<1x32xf32> to vector<8x32xf32>
    %279 = arith.mulf %277, %278 : vector<8x32xf32>
    %280 = vector.broadcast %259 : vector<1x32xf32> to vector<8x32xf32>
    %281 = arith.addf %279, %280 : vector<8x32xf32>
    %282 = vector.extract_strided_slice %281 {offsets = [0, 0], sizes = [1, 32], strides = [1, 1]} : vector<8x32xf32> to vector<1x32xf32>
    %283 = arith.truncf %282 : vector<1x32xf32> to vector<1x32xbf16>
    %c0_138 = arith.constant 0 : index
    %c0_139 = arith.constant 0 : index
    %284 = vector.load %arg17[%c0_138, %c0_139] : memref<32x32xbf16, #tpu.memory_space<vmem>>, vector<32x32xbf16>
    %cst_140 = arith.constant dense<0.000000e+00> : vector<1x32xf32>
    %285 = tpu.matmul %283, %284, %cst_140 {dimension_numbers = #tpu.dot_dimension_numbers<[1], [0], [0], [1], [0, 0, 1, 1], [], []>} : vector<1x32xbf16>, vector<32x32xbf16>, vector<1x32xf32> -> vector<1x32xf32>
    %c0_141 = arith.constant 0 : index
    %c0_142 = arith.constant 0 : index
    %286 = vector.load %arg18[%c0_141, %c0_142] : memref<1x32xf32, #tpu.memory_space<vmem>>, vector<1x32xf32>
    %287 = arith.addf %285, %286 : vector<1x32xf32>
    %288 = math.tanh %287 : vector<1x32xf32>
    %289 = arith.truncf %288 : vector<1x32xf32> to vector<1x32xbf16>
    %c0_143 = arith.constant 0 : index
    %c0_144 = arith.constant 0 : index
    %290 = vector.load %arg19[%c0_143, %c0_144] : memref<32x3xbf16, #tpu.memory_space<vmem>>, vector<32x3xbf16>
    %cst_145 = arith.constant dense<0.000000e+00> : vector<1x3xf32>
    %291 = tpu.matmul %289, %290, %cst_145 {dimension_numbers = #tpu.dot_dimension_numbers<[1], [0], [0], [1], [0, 0, 1, 1], [], []>} : vector<1x32xbf16>, vector<32x3xbf16>, vector<1x3xf32> -> vector<1x3xf32>
    %c0_146 = arith.constant 0 : index
    %c0_147 = arith.constant 0 : index
    %292 = vector.load %arg20[%c0_146, %c0_147] : memref<1x3xf32, #tpu.memory_space<vmem>>, vector<1x3xf32>
    %293 = arith.addf %291, %292 : vector<1x3xf32>
    %c0_148 = arith.constant 0 : index
    %c0_149 = arith.constant 0 : index
    %c0_150 = arith.constant 0 : index
    %294 = vector.load %arg21[%c0_148, %c0_149, %c0_150] : memref<1x1x3xf32, #tpu.memory_space<vmem>>, vector<1x1x3xf32>
    %295 = vector.shape_cast %294 : vector<1x1x3xf32> to vector<1x3xf32>
    %296 = vector.shape_cast %293 : vector<1x3xf32> to vector<1x1x3xf32>
    tpu.vector_store %arg21[%c0_148, %c0_149, %c0_150], %296 {strides = array<i32>} : memref<1x1x3xf32, #tpu.memory_space<vmem>>, vector<1x1x3xf32>,
    return
  }
  func.func @transform_0(%arg0: i32) -> (i32, i32, i32) {
    %c0_i32 = arith.constant 0 : i32
    %c0_i32_0 = arith.constant 0 : i32
    %c0_i32_1 = arith.constant 0 : i32
    return %arg0, %c0_i32, %c0_i32_0 : i32, i32, i32
  }
  func.func @transform_1(%arg0: i32) -> (i32, i32, i32) {
    %c0_i32 = arith.constant 0 : i32
    %c0_i32_0 = arith.constant 0 : i32
    %c0_i32_1 = arith.constant 0 : i32
    return %arg0, %c0_i32, %c0_i32_0 : i32, i32, i32
  }
  func.func @transform_2(%arg0: i32) -> (i32, i32) {
    %c0_i32 = arith.constant 0 : i32
    %c0_i32_0 = arith.constant 0 : i32
    %c0_i32_1 = arith.constant 0 : i32
    return %c0_i32, %c0_i32_0 : i32, i32
  }
  func.func @transform_3(%arg0: i32) -> (i32, i32) {
    %c0_i32 = arith.constant 0 : i32
    %c0_i32_0 = arith.constant 0 : i32
    %c0_i32_1 = arith.constant 0 : i32
    return %c0_i32, %c0_i32_0 : i32, i32
  }
  func.func @transform_4(%arg0: i32) -> (i32, i32, i32, i32) {
    %c0_i32 = arith.constant 0 : i32
    %c0_i32_0 = arith.constant 0 : i32
    %c0_i32_1 = arith.constant 0 : i32
    %c0_i32_2 = arith.constant 0 : i32
    %c0_i32_3 = arith.constant 0 : i32
    return %c0_i32, %c0_i32_0, %c0_i32_1, %c0_i32_2 : i32, i32, i32, i32
  }
  func.func @transform_5(%arg0: i32) -> (i32, i32, i32, i32) {
    %c0_i32 = arith.constant 0 : i32
    %c0_i32_0 = arith.constant 0 : i32
    %c0_i32_1 = arith.constant 0 : i32
    %c0_i32_2 = arith.constant 0 : i32
    %c0_i32_3 = arith.constant 0 : i32
    return %c0_i32, %c0_i32_0, %c0_i32_1, %c0_i32_2 : i32, i32, i32, i32
  }
  func.func @transform_6(%arg0: i32) -> (i32, i32, i32, i32) {
    %c0_i32 = arith.constant 0 : i32
    %c0_i32_0 = arith.constant 0 : i32
    %c0_i32_1 = arith.constant 0 : i32
    %c0_i32_2 = arith.constant 0 : i32
    %c0_i32_3 = arith.constant 0 : i32
    return %c0_i32, %c0_i32_0, %c0_i32_1, %c0_i32_2 : i32, i32, i32, i32
  }
  func.func @transform_7(%arg0: i32) -> (i32, i32, i32) {
    %c0_i32 = arith.constant 0 : i32
    %c0_i32_0 = arith.constant 0 : i32
    %c0_i32_1 = arith.constant 0 : i32
    %c0_i32_2 = arith.constant 0 : i32
    return %c0_i32, %c0_i32_0, %c0_i32_1 : i32, i32, i32
  }
  func.func @transform_8(%arg0: i32) -> (i32, i32, i32) {
    %c0_i32 = arith.constant 0 : i32
    %c0_i32_0 = arith.constant 0 : i32
    %c0_i32_1 = arith.constant 0 : i32
    %c0_i32_2 = arith.constant 0 : i32
    return %c0_i32, %c0_i32_0, %c0_i32_1 : i32, i32, i32
  }
  func.func @transform_9(%arg0: i32) -> (i32, i32, i32) {
    %c0_i32 = arith.constant 0 : i32
    %c0_i32_0 = arith.constant 0 : i32
    %c0_i32_1 = arith.constant 0 : i32
    %c0_i32_2 = arith.constant 0 : i32
    return %c0_i32, %c0_i32_0, %c0_i32_1 : i32, i32, i32
  }
  func.func @transform_10(%arg0: i32) -> (i32, i32, i32) {
    %c0_i32 = arith.constant 0 : i32
    %c0_i32_0 = arith.constant 0 : i32
    %c0_i32_1 = arith.constant 0 : i32
    %c0_i32_2 = arith.constant 0 : i32
    return %c0_i32, %c0_i32_0, %c0_i32_1 : i32, i32, i32
  }
  func.func @transform_11(%arg0: i32) -> (i32, i32, i32) {
    %c0_i32 = arith.constant 0 : i32
    %c0_i32_0 = arith.constant 0 : i32
    %c0_i32_1 = arith.constant 0 : i32
    %c0_i32_2 = arith.constant 0 : i32
    return %c0_i32, %c0_i32_0, %c0_i32_1 : i32, i32, i32
  }
  func.func @transform_12(%arg0: i32) -> (i32, i32, i32) {
    %c0_i32 = arith.constant 0 : i32
    %c0_i32_0 = arith.constant 0 : i32
    %c0_i32_1 = arith.constant 0 : i32
    %c0_i32_2 = arith.constant 0 : i32
    return %c0_i32, %c0_i32_0, %c0_i32_1 : i32, i32, i32
  }
  func.func @transform_13(%arg0: i32) -> (i32, i32, i32) {
    %c0_i32 = arith.constant 0 : i32
    %c0_i32_0 = arith.constant 0 : i32
    %c0_i32_1 = arith.constant 0 : i32
    %c0_i32_2 = arith.constant 0 : i32
    return %c0_i32, %c0_i32_0, %c0_i32_1 : i32, i32, i32
  }
  func.func @transform_14(%arg0: i32) -> (i32, i32, i32) {
    %c0_i32 = arith.constant 0 : i32
    %c0_i32_0 = arith.constant 0 : i32
    %c0_i32_1 = arith.constant 0 : i32
    %c0_i32_2 = arith.constant 0 : i32
    return %c0_i32, %c0_i32_0, %c0_i32_1 : i32, i32, i32
  }
  func.func @transform_15(%arg0: i32) -> (i32, i32, i32) {
    %c0_i32 = arith.constant 0 : i32
    %c0_i32_0 = arith.constant 0 : i32
    %c0_i32_1 = arith.constant 0 : i32
    %c0_i32_2 = arith.constant 0 : i32
    return %c0_i32, %c0_i32_0, %c0_i32_1 : i32, i32, i32
  }
  func.func @transform_16(%arg0: i32) -> (i32, i32) {
    %c0_i32 = arith.constant 0 : i32
    %c0_i32_0 = arith.constant 0 : i32
    %c0_i32_1 = arith.constant 0 : i32
    return %c0_i32, %c0_i32_0 : i32, i32
  }
  func.func @transform_17(%arg0: i32) -> (i32, i32) {
    %c0_i32 = arith.constant 0 : i32
    %c0_i32_0 = arith.constant 0 : i32
    %c0_i32_1 = arith.constant 0 : i32
    return %c0_i32, %c0_i32_0 : i32, i32
  }
  func.func @transform_18(%arg0: i32) -> (i32, i32) {
    %c0_i32 = arith.constant 0 : i32
    %c0_i32_0 = arith.constant 0 : i32
    %c0_i32_1 = arith.constant 0 : i32
    return %c0_i32, %c0_i32_0 : i32, i32
  }
  func.func @transform_19(%arg0: i32) -> (i32, i32) {
    %c0_i32 = arith.constant 0 : i32
    %c0_i32_0 = arith.constant 0 : i32
    %c0_i32_1 = arith.constant 0 : i32
    return %c0_i32, %c0_i32_0 : i32, i32
  }
  func.func @transform_20(%arg0: i32) -> (i32, i32, i32) {
    %c0_i32 = arith.constant 0 : i32
    %c0_i32_0 = arith.constant 0 : i32
    %c0_i32_1 = arith.constant 0 : i32
    return %arg0, %c0_i32, %c0_i32_0 : i32, i32, i32
  }
}

</mosaic_0001>

<llo_original>
// kernel: bert_classifier_forward.1
$region0: #{bert_classifier_forward.1}
  #allocation0 [shape = 'u32[]', space=smem, size = 0x4, offset = 0x4, fixed_abs, tag = 'smem constant byte address 0x4 - core index']
  #allocation1 [shape = 'u32[72,128]{1,0:T(1,128)}', space=vmem, size = 0x9000, scoped, tag = 'internal scratch']
  %s0 = inlined_call_operand.vmem [shape: f32[2,8,32], index: 0, kind: input, shape index: {}]
  %s1 = inlined_call_operand.vmem [shape: f32[2,1,8], index: 1, kind: input, shape index: {}]
  %s2 = inlined_call_operand.vmem [shape: f32[1,32], index: 2, kind: input, shape index: {}]
  %s3 = inlined_call_operand.vmem [shape: f32[1,32], index: 3, kind: input, shape index: {}]
  %s4 = inlined_call_operand.vmem [shape: bf16[2,6,32,16], index: 4, kind: input, shape index: {}]
  %s5 = inlined_call_operand.vmem [shape: f32[2,6,1,16], index: 5, kind: input, shape index: {}]
  %s6 = inlined_call_operand.vmem [shape: bf16[2,2,16,32], index: 6, kind: input, shape index: {}]
  %s7 = inlined_call_operand.vmem [shape: f32[2,1,32], index: 7, kind: input, shape index: {}]
  %s8 = inlined_call_operand.vmem [shape: f32[2,1,32], index: 8, kind: input, shape index: {}]
  %s9 = inlined_call_operand.vmem [shape: f32[2,1,32], index: 9, kind: input, shape index: {}]
  %s10 = inlined_call_operand.vmem [shape: bf16[2,32,64], index: 10, kind: input, shape index: {}]
  %s11 = inlined_call_operand.vmem [shape: f32[2,1,64], index: 11, kind: input, shape index: {}]
  %s12 = inlined_call_operand.vmem [shape: bf16[2,64,32], index: 12, kind: input, shape index: {}]
  %s13 = inlined_call_operand.vmem [shape: f32[2,1,32], index: 13, kind: input, shape index: {}]
  %s14 = inlined_call_operand.vmem [shape: f32[2,1,32], index: 14, kind: input, shape index: {}]
  %s15 = inlined_call_operand.vmem [shape: f32[2,1,32], index: 15, kind: input, shape index: {}]
  %s16 = inlined_call_operand.vmem [shape: bf16[32,32], index: 16, kind: input, shape index: {}]
  %s17 = inlined_call_operand.vmem [shape: f32[1,32], index: 17, kind: input, shape index: {}]
  %s18 = inlined_call_operand.vmem [shape: bf16[32,3], index: 18, kind: input, shape index: {}]
  %s19 = inlined_call_operand.vmem [shape: f32[1,3], index: 19, kind: input, shape index: {}]
  %s20 = inlined_call_operand.hbm [shape: f32[2,1,3], index: 20, kind: output, shape index: {}]
  %s21 = sld [smem:[#allocation0]]
  $region113: #{bert_classifier_forward.1} parent=0
    _
  %s23 = ssub.s32 1, %s21
  %s24 = scalar_select 0, %s23, %s21
  $region1: #{bert_classifier_forward.1} parent=0
    #allocation2 [shape = 'u8[1024]{0}', space=vmem, size = 0x400, scoped, tag = 'output window, operand 0']
    #allocation3 [shape = 's32[2]{0}', space=sflag, size = 0x8, scoped, tag = 'scoped memory for bert_classifier_forward.1']
    %25 = vsyncpa [#allocation3], 0
    %s26 = scalar_lea.sflag [#allocation3], 1
    %27 = vsyncpa %s26, 0
    loop: start=0, step=1, limit=4
    $region2: #{bert_classifier_forward.1} parent=1 // loop_pre_header
      _
    $region3: #{bert_classifier_forward.1} parent=1 // loop_header
      %s29 = sphi 0, %s33
      %p30 = scmp.ge.s32.totalorder %s29, 4
      %s39 = sphi 0, %s41
      %s42 = sphi 0, %s39
      %s43 = sphi 0, %s42
      %s59 = sphi 0, %s43
      %s65 = sphi 0, %s67
      %s68 = sphi 0, %s65
      %s69 = sphi 0, %s68
      %s85 = sphi 0, %s69
      %s89 = sphi 0, %s89
      %s91 = sphi 0, %s89
      %s92 = sphi 0, %s91
      %s106 = sphi 0, %s92
      %s110 = sphi 0, %s110
      %s112 = sphi 0, %s110
      %s113 = sphi 0, %s112
      %s127 = sphi 0, %s113
      %s131 = sphi 0, %s131
      %s133 = sphi 0, %s131
      %s134 = sphi 0, %s133
      %s148 = sphi 0, %s134
      %s152 = sphi 0, %s152
      %s154 = sphi 0, %s152
      %s155 = sphi 0, %s154
      %s169 = sphi 0, %s155
      %s173 = sphi 0, %s173
      %s175 = sphi 0, %s173
      %s176 = sphi 0, %s175
      %s190 = sphi 0, %s176
      %s194 = sphi 0, %s194
      %s196 = sphi 0, %s194
      %s197 = sphi 0, %s196
      %s211 = sphi 0, %s197
      %s215 = sphi 0, %s215
      %s217 = sphi 0, %s215
      %s218 = sphi 0, %s217
      %s232 = sphi 0, %s218
      %s236 = sphi 0, %s236
      %s238 = sphi 0, %s236
      %s239 = sphi 0, %s238
      %s253 = sphi 0, %s239
      %s257 = sphi 0, %s257
      %s259 = sphi 0, %s257
      %s260 = sphi 0, %s259
      %s274 = sphi 0, %s260
      %s278 = sphi 0, %s278
      %s280 = sphi 0, %s278
      %s281 = sphi 0, %s280
      %s295 = sphi 0, %s281
      %s299 = sphi 0, %s299
      %s301 = sphi 0, %s299
      %s302 = sphi 0, %s301
      %s316 = sphi 0, %s302
      %s320 = sphi 0, %s320
      %s322 = sphi 0, %s320
      %s323 = sphi 0, %s322
      %s337 = sphi 0, %s323
      %s341 = sphi 0, %s341
      %s343 = sphi 0, %s341
      %s344 = sphi 0, %s343
      %s358 = sphi 0, %s344
      %s362 = sphi 0, %s362
      %s364 = sphi 0, %s362
      %s365 = sphi 0, %s364
      %s379 = sphi 0, %s365
      %s383 = sphi 0, %s383
      %s385 = sphi 0, %s383
      %s386 = sphi 0, %s385
      %s400 = sphi 0, %s386
      %s404 = sphi 0, %s404
      %s406 = sphi 0, %s404
      %s407 = sphi 0, %s406
      %s421 = sphi 0, %s407
      %s425 = sphi 0, %s425
      %s427 = sphi 0, %s425
      %s428 = sphi 0, %s427
      %s442 = sphi 0, %s428
      %s446 = sphi 0, %s446
      %s448 = sphi 0, %s446
      %s449 = sphi 0, %s448
      %s463 = sphi 0, %s449
      %s469 = sphi 0, %s471
      %s472 = sphi 0, %s469
      %s473 = sphi 0, %s472
      %s489 = sphi 0, %s473
    $region4: #{bert_classifier_forward.1} parent=1 // loop_header_branch
      %32 = sbr.rel (%p30) target = $region8
    $region5: #{bert_classifier_forward.1} parent=1 // loop_body
      %s34 = ssub.s32 %s29, 1
      %s35 = ssub.s32 %s29, 2
      %s36 = sadd.s32 %s29, 1
      %s37 = ssub.s32 %s29, %s36
      %p38 = scmp.eq.s32.totalorder %s37, 0
      %s40 = sadd.s32 %s39, 1
      %s41 = scalar_select %p38, %s39, %s40
      %p44 = pneg %p38
      %p45 = scmp.eq.s32.totalorder %s29, 1
      %p46 = por %p44, %p45
      %p47 = scmp.ne.s32.totalorder %s39, %s42
      %p48 = scmp.eq.s32.totalorder %s29, 0
      %p49 = por %p47, %p48
      %p50 = scmp.ne.s32.totalorder %s39, %s42
      %p51 = scmp.eq.s32.totalorder %s34, 1
      %p52 = por %p50, %p51
      %p53 = scmp.ne.s32.totalorder %s42, %s43
      %p54 = scmp.eq.s32.totalorder %s34, 0
      %p55 = por %p53, %p54
      %p56 = scmp.ne.s32.totalorder %s42, %s43
      %p57 = scmp.eq.s32.totalorder %s35, 1
      %p58 = por %p56, %p57
      %p60 = scmp.ne.s32.totalorder %s43, %s59
      %p61 = scmp.eq.s32.totalorder %s35, 0
      %p62 = por %p60, %p61
      %s63 = ssub.s32 %s29, %s36
      %p64 = scmp.eq.s32.totalorder %s63, 0
      %s66 = sadd.s32 %s65, 1
      %s67 = scalar_select %p64, %s65, %s66
      %p70 = pneg %p64
      %p71 = scmp.eq.s32.totalorder %s29, 1
      %p72 = por %p70, %p71
      %p73 = scmp.ne.s32.totalorder %s65, %s68
      %p74 = scmp.eq.s32.totalorder %s29, 0
      %p75 = por %p73, %p74
      %p76 = scmp.ne.s32.totalorder %s65, %s68
      %p77 = scmp.eq.s32.totalorder %s34, 1
      %p78 = por %p76, %p77
      %p79 = scmp.ne.s32.totalorder %s68, %s69
      %p80 = scmp.eq.s32.totalorder %s34, 0
      %p81 = por %p79, %p80
      %p82 = scmp.ne.s32.totalorder %s68, %s69
      %p83 = scmp.eq.s32.totalorder %s35, 1
      %p84 = por %p82, %p83
      %p86 = scmp.ne.s32.totalorder %s69, %s85
      %p87 = scmp.eq.s32.totalorder %s35, 0
      %p88 = por %p86, %p87
      %s90 = sadd.s32 %s89, 1
      %p93 = scmp.eq.s32.totalorder %s29, 1
      %p94 = scmp.ne.s32.totalorder %s89, %s91
      %p95 = scmp.eq.s32.totalorder %s29, 0
      %p96 = por %p94, %p95
      %p97 = scmp.ne.s32.totalorder %s89, %s91
      %p98 = scmp.eq.s32.totalorder %s34, 1
      %p99 = por %p97, %p98
      %p100 = scmp.ne.s32.totalorder %s91, %s92
      %p101 = scmp.eq.s32.totalorder %s34, 0
      %p102 = por %p100, %p101
      %p103 = scmp.ne.s32.totalorder %s91, %s92
      %p104 = scmp.eq.s32.totalorder %s35, 1
      %p105 = por %p103, %p104
      %p107 = scmp.ne.s32.totalorder %s92, %s106
      %p108 = scmp.eq.s32.totalorder %s35, 0
      %p109 = por %p107, %p108
      %s111 = sadd.s32 %s110, 1
      %p114 = scmp.eq.s32.totalorder %s29, 1
      %p115 = scmp.ne.s32.totalorder %s110, %s112
      %p116 = scmp.eq.s32.totalorder %s29, 0
      %p117 = por %p115, %p116
      %p118 = scmp.ne.s32.totalorder %s110, %s112
      %p119 = scmp.eq.s32.totalorder %s34, 1
      %p120 = por %p118, %p119
      %p121 = scmp.ne.s32.totalorder %s112, %s113
      %p122 = scmp.eq.s32.totalorder %s34, 0
      %p123 = por %p121, %p122
      %p124 = scmp.ne.s32.totalorder %s112, %s113
      %p125 = scmp.eq.s32.totalorder %s35, 1
      %p126 = por %p124, %p125
      %p128 = scmp.ne.s32.totalorder %s113, %s127
      %p129 = scmp.eq.s32.totalorder %s35, 0
      %p130 = por %p128, %p129
      %s132 = sadd.s32 %s131, 1
      %p135 = scmp.eq.s32.totalorder %s29, 1
      %p136 = scmp.ne.s32.totalorder %s131, %s133
      %p137 = scmp.eq.s32.totalorder %s29, 0
      %p138 = por %p136, %p137
      %p139 = scmp.ne.s32.totalorder %s131, %s133
      %p140 = scmp.eq.s32.totalorder %s34, 1
      %p141 = por %p139, %p140
      %p142 = scmp.ne.s32.totalorder %s133, %s134
      %p143 = scmp.eq.s32.totalorder %s34, 0
      %p144 = por %p142, %p143
      %p145 = scmp.ne.s32.totalorder %s133, %s134
      %p146 = scmp.eq.s32.totalorder %s35, 1
      %p147 = por %p145, %p146
      %p149 = scmp.ne.s32.totalorder %s134, %s148
      %p150 = scmp.eq.s32.totalorder %s35, 0
      %p151 = por %p149, %p150
      %s153 = sadd.s32 %s152, 1
      %p156 = scmp.eq.s32.totalorder %s29, 1
      %p157 = scmp.ne.s32.totalorder %s152, %s154
      %p158 = scmp.eq.s32.totalorder %s29, 0
      %p159 = por %p157, %p158
      %p160 = scmp.ne.s32.totalorder %s152, %s154
      %p161 = scmp.eq.s32.totalorder %s34, 1
      %p162 = por %p160, %p161
      %p163 = scmp.ne.s32.totalorder %s154, %s155
      %p164 = scmp.eq.s32.totalorder %s34, 0
      %p165 = por %p163, %p164
      %p166 = scmp.ne.s32.totalorder %s154, %s155
      %p167 = scmp.eq.s32.totalorder %s35, 1
      %p168 = por %p166, %p167
      %p170 = scmp.ne.s32.totalorder %s155, %s169
      %p171 = scmp.eq.s32.totalorder %s35, 0
      %p172 = por %p170, %p171
      %s174 = sadd.s32 %s173, 1
      %p177 = scmp.eq.s32.totalorder %s29, 1
      %p178 = scmp.ne.s32.totalorder %s173, %s175
      %p179 = scmp.eq.s32.totalorder %s29, 0
      %p180 = por %p178, %p179
      %p181 = scmp.ne.s32.totalorder %s173, %s175
      %p182 = scmp.eq.s32.totalorder %s34, 1
      %p183 = por %p181, %p182
      %p184 = scmp.ne.s32.totalorder %s175, %s176
      %p185 = scmp.eq.s32.totalorder %s34, 0
      %p186 = por %p184, %p185
      %p187 = scmp.ne.s32.totalorder %s175, %s176
      %p188 = scmp.eq.s32.totalorder %s35, 1
      %p189 = por %p187, %p188
      %p191 = scmp.ne.s32.totalorder %s176, %s190
      %p192 = scmp.eq.s32.totalorder %s35, 0
      %p193 = por %p191, %p192
      %s195 = sadd.s32 %s194, 1
      %p198 = scmp.eq.s32.totalorder %s29, 1
      %p199 = scmp.ne.s32.totalorder %s194, %s196
      %p200 = scmp.eq.s32.totalorder %s29, 0
      %p201 = por %p199, %p200
      %p202 = scmp.ne.s32.totalorder %s194, %s196
      %p203 = scmp.eq.s32.totalorder %s34, 1
      %p204 = por %p202, %p203
      %p205 = scmp.ne.s32.totalorder %s196, %s197
      %p206 = scmp.eq.s32.totalorder %s34, 0
      %p207 = por %p205, %p206
      %p208 = scmp.ne.s32.totalorder %s196, %s197
      %p209 = scmp.eq.s32.totalorder %s35, 1
      %p210 = por %p208, %p209
      %p212 = scmp.ne.s32.totalorder %s197, %s211
      %p213 = scmp.eq.s32.totalorder %s35, 0
      %p214 = por %p212, %p213
      %s216 = sadd.s32 %s215, 1
      %p219 = scmp.eq.s32.totalorder %s29, 1
      %p220 = scmp.ne.s32.totalorder %s215, %s217
      %p221 = scmp.eq.s32.totalorder %s29, 0
      %p222 = por %p220, %p221
      %p223 = scmp.ne.s32.totalorder %s215, %s217
      %p224 = scmp.eq.s32.totalorder %s34, 1
      %p225 = por %p223, %p224
      %p226 = scmp.ne.s32.totalorder %s217, %s218
      %p227 = scmp.eq.s32.totalorder %s34, 0
      %p228 = por %p226, %p227
      %p229 = scmp.ne.s32.totalorder %s217, %s218
      %p230 = scmp.eq.s32.totalorder %s35, 1
      %p231 = por %p229, %p230
      %p233 = scmp.ne.s32.totalorder %s218, %s232
      %p234 = scmp.eq.s32.totalorder %s35, 0
      %p235 = por %p233, %p234
      %s237 = sadd.s32 %s236, 1
      %p240 = scmp.eq.s32.totalorder %s29, 1
      %p241 = scmp.ne.s32.totalorder %s236, %s238
      %p242 = scmp.eq.s32.totalorder %s29, 0
      %p243 = por %p241, %p242
      %p244 = scmp.ne.s32.totalorder %s236, %s238
      %p245 = scmp.eq.s32.totalorder %s34, 1
      %p246 = por %p244, %p245
      %p247 = scmp.ne.s32.totalorder %s238, %s239
      %p248 = scmp.eq.s32.totalorder %s34, 0
      %p249 = por %p247, %p248
      %p250 = scmp.ne.s32.totalorder %s238, %s239
      %p251 = scmp.eq.s32.totalorder %s35, 1
      %p252 = por %p250, %p251
      %p254 = scmp.ne.s32.totalorder %s239, %s253
      %p255 = scmp.eq.s32.totalorder %s35, 0
      %p256 = por %p254, %p255
      %s258 = sadd.s32 %s257, 1
      %p261 = scmp.eq.s32.totalorder %s29, 1
      %p262 = scmp.ne.s32.totalorder %s257, %s259
      %p263 = scmp.eq.s32.totalorder %s29, 0
      %p264 = por %p262, %p263
      %p265 = scmp.ne.s32.totalorder %s257, %s259
      %p266 = scmp.eq.s32.totalorder %s34, 1
      %p267 = por %p265, %p266
      %p268 = scmp.ne.s32.totalorder %s259, %s260
      %p269 = scmp.eq.s32.totalorder %s34, 0
      %p270 = por %p268, %p269
      %p271 = scmp.ne.s32.totalorder %s259, %s260
      %p272 = scmp.eq.s32.totalorder %s35, 1
      %p273 = por %p271, %p272
      %p275 = scmp.ne.s32.totalorder %s260, %s274
      %p276 = scmp.eq.s32.totalorder %s35, 0
      %p277 = por %p275, %p276
      %s279 = sadd.s32 %s278, 1
      %p282 = scmp.eq.s32.totalorder %s29, 1
      %p283 = scmp.ne.s32.totalorder %s278, %s280
      %p284 = scmp.eq.s32.totalorder %s29, 0
      %p285 = por %p283, %p284
      %p286 = scmp.ne.s32.totalorder %s278, %s280
      %p287 = scmp.eq.s32.totalorder %s34, 1
      %p288 = por %p286, %p287
      %p289 = scmp.ne.s32.totalorder %s280, %s281
      %p290 = scmp.eq.s32.totalorder %s34, 0
      %p291 = por %p289, %p290
      %p292 = scmp.ne.s32.totalorder %s280, %s281
      %p293 = scmp.eq.s32.totalorder %s35, 1
      %p294 = por %p292, %p293
      %p296 = scmp.ne.s32.totalorder %s281, %s295
      %p297 = scmp.eq.s32.totalorder %s35, 0
      %p298 = por %p296, %p297
      %s300 = sadd.s32 %s299, 1
      %p303 = scmp.eq.s32.totalorder %s29, 1
      %p304 = scmp.ne.s32.totalorder %s299, %s301
      %p305 = scmp.eq.s32.totalorder %s29, 0
      %p306 = por %p304, %p305
      %p307 = scmp.ne.s32.totalorder %s299, %s301
      %p308 = scmp.eq.s32.totalorder %s34, 1
      %p309 = por %p307, %p308
      %p310 = scmp.ne.s32.totalorder %s301, %s302
      %p311 = scmp.eq.s32.totalorder %s34, 0
      %p312 = por %p310, %p311
      %p313 = scmp.ne.s32.totalorder %s301, %s302
      %p314 = scmp.eq.s32.totalorder %s35, 1
      %p315 = por %p313, %p314
      %p317 = scmp.ne.s32.totalorder %s302, %s316
      %p318 = scmp.eq.s32.totalorder %s35, 0
      %p319 = por %p317, %p318
      %s321 = sadd.s32 %s320, 1
      %p324 = scmp.eq.s32.totalorder %s29, 1
      %p325 = scmp.ne.s32.totalorder %s320, %s322
      %p326 = scmp.eq.s32.totalorder %s29, 0
      %p327 = por %p325, %p326
      %p328 = scmp.ne.s32.totalorder %s320, %s322
      %p329 = scmp.eq.s32.totalorder %s34, 1
      %p330 = por %p328, %p329
      %p331 = scmp.ne.s32.totalorder %s322, %s323
      %p332 = scmp.eq.s32.totalorder %s34, 0
      %p333 = por %p331, %p332
      %p334 = scmp.ne.s32.totalorder %s322, %s323
      %p335 = scmp.eq.s32.totalorder %s35, 1
      %p336 = por %p334, %p335
      %p338 = scmp.ne.s32.totalorder %s323, %s337
      %p339 = scmp.eq.s32.totalorder %s35, 0
      %p340 = por %p338, %p339
      %s342 = sadd.s32 %s341, 1
      %p345 = scmp.eq.s32.totalorder %s29, 1
      %p346 = scmp.ne.s32.totalorder %s341, %s343
      %p347 = scmp.eq.s32.totalorder %s29, 0
      %p348 = por %p346, %p347
      %p349 = scmp.ne.s32.totalorder %s341, %s343
      %p350 = scmp.eq.s32.totalorder %s34, 1
      %p351 = por %p349, %p350
      %p352 = scmp.ne.s32.totalorder %s343, %s344
      %p353 = scmp.eq.s32.totalorder %s34, 0
      %p354 = por %p352, %p353
      %p355 = scmp.ne.s32.totalorder %s343, %s344
      %p356 = scmp.eq.s32.totalorder %s35, 1
      %p357 = por %p355, %p356
      %p359 = scmp.ne.s32.totalorder %s344, %s358
      %p360 = scmp.eq.s32.totalorder %s35, 0
      %p361 = por %p359, %p360
      %s363 = sadd.s32 %s362, 1
      %p366 = scmp.eq.s32.totalorder %s29, 1
      %p367 = scmp.ne.s32.totalorder %s362, %s364
      %p368 = scmp.eq.s32.totalorder %s29, 0
      %p369 = por %p367, %p368
      %p370 = scmp.ne.s32.totalorder %s362, %s364
      %p371 = scmp.eq.s32.totalorder %s34, 1
      %p372 = por %p370, %p371
      %p373 = scmp.ne.s32.totalorder %s364, %s365
      %p374 = scmp.eq.s32.totalorder %s34, 0
      %p375 = por %p373, %p374
      %p376 = scmp.ne.s32.totalorder %s364, %s365
      %p377 = scmp.eq.s32.totalorder %s35, 1
      %p378 = por %p376, %p377
      %p380 = scmp.ne.s32.totalorder %s365, %s379
      %p381 = scmp.eq.s32.totalorder %s35, 0
      %p382 = por %p380, %p381
      %s384 = sadd.s32 %s383, 1
      %p387 = scmp.eq.s32.totalorder %s29, 1
      %p388 = scmp.ne.s32.totalorder %s383, %s385
      %p389 = scmp.eq.s32.totalorder %s29, 0
      %p390 = por %p388, %p389
      %p391 = scmp.ne.s32.totalorder %s383, %s385
      %p392 = scmp.eq.s32.totalorder %s34, 1
      %p393 = por %p391, %p392
      %p394 = scmp.ne.s32.totalorder %s385, %s386
      %p395 = scmp.eq.s32.totalorder %s34, 0
      %p396 = por %p394, %p395
      %p397 = scmp.ne.s32.totalorder %s385, %s386
      %p398 = scmp.eq.s32.totalorder %s35, 1
      %p399 = por %p397, %p398
      %p401 = scmp.ne.s32.totalorder %s386, %s400
      %p402 = scmp.eq.s32.totalorder %s35, 0
      %p403 = por %p401, %p402
      %s405 = sadd.s32 %s404, 1
      %p408 = scmp.eq.s32.totalorder %s29, 1
      %p409 = scmp.ne.s32.totalorder %s404, %s406
      %p410 = scmp.eq.s32.totalorder %s29, 0
      %p411 = por %p409, %p410
      %p412 = scmp.ne.s32.totalorder %s404, %s406
      %p413 = scmp.eq.s32.totalorder %s34, 1
      %p414 = por %p412, %p413
      %p415 = scmp.ne.s32.totalorder %s406, %s407
      %p416 = scmp.eq.s32.totalorder %s34, 0
      %p417 = por %p415, %p416
      %p418 = scmp.ne.s32.totalorder %s406, %s407
      %p419 = scmp.eq.s32.totalorder %s35, 1
      %p420 = por %p418, %p419
      %p422 = scmp.ne.s32.totalorder %s407, %s421
      %p423 = scmp.eq.s32.totalorder %s35, 0
      %p424 = por %p422, %p423
      %s426 = sadd.s32 %s425, 1
      %p429 = scmp.eq.s32.totalorder %s29, 1
      %p430 = scmp.ne.s32.totalorder %s425, %s427
      %p431 = scmp.eq.s32.totalorder %s29, 0
      %p432 = por %p430, %p431
      %p433 = scmp.ne.s32.totalorder %s425, %s427
      %p434 = scmp.eq.s32.totalorder %s34, 1
      %p435 = por %p433, %p434
      %p436 = scmp.ne.s32.totalorder %s427, %s428
      %p437 = scmp.eq.s32.totalorder %s34, 0
      %p438 = por %p436, %p437
      %p439 = scmp.ne.s32.totalorder %s427, %s428
      %p440 = scmp.eq.s32.totalorder %s35, 1
      %p441 = por %p439, %p440
      %p443 = scmp.ne.s32.totalorder %s428, %s442
      %p444 = scmp.eq.s32.totalorder %s35, 0
      %p445 = por %p443, %p444
      %s447 = sadd.s32 %s446, 1
      %p450 = scmp.eq.s32.totalorder %s29, 1
      %p451 = scmp.ne.s32.totalorder %s446, %s448
      %p452 = scmp.eq.s32.totalorder %s29, 0
      %p453 = por %p451, %p452
      %p454 = scmp.ne.s32.totalorder %s446, %s448
      %p455 = scmp.eq.s32.totalorder %s34, 1
      %p456 = por %p454, %p455
      %p457 = scmp.ne.s32.totalorder %s448, %s449
      %p458 = scmp.eq.s32.totalorder %s34, 0
      %p459 = por %p457, %p458
      %p460 = scmp.ne.s32.totalorder %s448, %s449
      %p461 = scmp.eq.s32.totalorder %s35, 1
      %p462 = por %p460, %p461
      %p464 = scmp.ne.s32.totalorder %s449, %s463
      %p465 = scmp.eq.s32.totalorder %s35, 0
      %p466 = por %p464, %p465
      %s467 = ssub.s32 %s29, %s36
      %p468 = scmp.eq.s32.totalorder %s467, 0
      %s470 = sadd.s32 %s469, 1
      %s471 = scalar_select %p468, %s469, %s470
      %p474 = pneg %p468
      %p475 = scmp.eq.s32.totalorder %s29, 1
      %p476 = por %p474, %p475
      %p477 = scmp.ne.s32.totalorder %s469, %s472
      %p478 = scmp.eq.s32.totalorder %s29, 0
      %p479 = por %p477, %p478
      %p480 = scmp.ne.s32.totalorder %s469, %s472
      %p481 = scmp.eq.s32.totalorder %s34, 1
      %p482 = por %p480, %p481
      %p483 = scmp.ne.s32.totalorder %s472, %s473
      %p484 = scmp.eq.s32.totalorder %s34, 0
      %p485 = por %p483, %p484
      %p486 = scmp.ne.s32.totalorder %s472, %s473
      %p487 = scmp.eq.s32.totalorder %s35, 1
      %p488 = por %p486, %p487
      %p490 = scmp.ne.s32.totalorder %s473, %s489
      %p491 = scmp.eq.s32.totalorder %s35, 0
      %p492 = por %p490, %p491
      %p493 = scmp.le.s32.totalorder 1, %s29
      %p494 = scmp.lt.s32.totalorder %s29, 3
      %p495 = pnand %p493, %p494
      %p496 = pneg %p495
      // Predicated region
      $region9: #{bert_classifier_forward.1} parent=5 // pred_check
        _
      $region10: #{bert_classifier_forward.1} parent=5 // pred_check_branch
        %498 = sbr.rel (%p495) target = $region12
      $region11: #{bert_classifier_forward.1} parent=5 // pred_region
        %s499 = ssub.s32 %s29, 1
        // Predicated region
        $region13: #{bert_classifier_forward.1} parent=11 // pred_check
          %p500 = pneg %p102
        $region14: #{bert_classifier_forward.1} parent=11 // pred_check_branch
          %502 = sbr.rel (%p500) target = $region16
        $region15: #{bert_classifier_forward.1} parent=11 // pred_region
          _
        $region16: #{bert_classifier_forward.1} parent=11 // pred_fallthru
          _
        // Predicated region
        $region17: #{bert_classifier_forward.1} parent=11 // pred_check
          %p503 = pneg %p123
        $region18: #{bert_classifier_forward.1} parent=11 // pred_check_branch
          %505 = sbr.rel (%p503) target = $region20
        $region19: #{bert_classifier_forward.1} parent=11 // pred_region
          _
        $region20: #{bert_classifier_forward.1} parent=11 // pred_fallthru
          _
        // Predicated region
        $region21: #{bert_classifier_forward.1} parent=11 // pred_check
          %p506 = pneg %p144
        $region22: #{bert_classifier_forward.1} parent=11 // pred_check_branch
          %508 = sbr.rel (%p506) target = $region24
        $region23: #{bert_classifier_forward.1} parent=11 // pred_region
          _
        $region24: #{bert_classifier_forward.1} parent=11 // pred_fallthru
          _
        // Predicated region
        $region25: #{bert_classifier_forward.1} parent=11 // pred_check
          %p509 = pneg %p165
        $region26: #{bert_classifier_forward.1} parent=11 // pred_check_branch
          %511 = sbr.rel (%p509) target = $region28
        $region27: #{bert_classifier_forward.1} parent=11 // pred_region
          _
        $region28: #{bert_classifier_forward.1} parent=11 // pred_fallthru
          _
        // Predicated region
        $region29: #{bert_classifier_forward.1} parent=11 // pred_check
          %p512 = pneg %p186
        $region30: #{bert_classifier_forward.1} parent=11 // pred_check_branch
          %514 = sbr.rel (%p512) target = $region32
        $region31: #{bert_classifier_forward.1} parent=11 // pred_region
          _
        $region32: #{bert_classifier_forward.1} parent=11 // pred_fallthru
          _
        // Predicated region
        $region33: #{bert_classifier_forward.1} parent=11 // pred_check
          %p515 = pneg %p207
        $region34: #{bert_classifier_forward.1} parent=11 // pred_check_branch
          %517 = sbr.rel (%p515) target = $region36
        $region35: #{bert_classifier_forward.1} parent=11 // pred_region
          _
        $region36: #{bert_classifier_forward.1} parent=11 // pred_fallthru
          _
        // Predicated region
        $region37: #{bert_classifier_forward.1} parent=11 // pred_check
          %p518 = pneg %p228
        $region38: #{bert_classifier_forward.1} parent=11 // pred_check_branch
          %520 = sbr.rel (%p518) target = $region40
        $region39: #{bert_classifier_forward.1} parent=11 // pred_region
          _
        $region40: #{bert_classifier_forward.1} parent=11 // pred_fallthru
          _
        // Predicated region
        $region41: #{bert_classifier_forward.1} parent=11 // pred_check
          %p521 = pneg %p249
        $region42: #{bert_classifier_forward.1} parent=11 // pred_check_branch
          %523 = sbr.rel (%p521) target = $region44
        $region43: #{bert_classifier_forward.1} parent=11 // pred_region
          _
        $region44: #{bert_classifier_forward.1} parent=11 // pred_fallthru
          _
        // Predicated region
        $region45: #{bert_classifier_forward.1} parent=11 // pred_check
          %p524 = pneg %p270
        $region46: #{bert_classifier_forward.1} parent=11 // pred_check_branch
          %526 = sbr.rel (%p524) target = $region48
        $region47: #{bert_classifier_forward.1} parent=11 // pred_region
          _
        $region48: #{bert_classifier_forward.1} parent=11 // pred_fallthru
          _
        // Predicated region
        $region49: #{bert_classifier_forward.1} parent=11 // pred_check
          %p527 = pneg %p291
        $region50: #{bert_classifier_forward.1} parent=11 // pred_check_branch
          %529 = sbr.rel (%p527) target = $region52
        $region51: #{bert_classifier_forward.1} parent=11 // pred_region
          _
        $region52: #{bert_classifier_forward.1} parent=11 // pred_fallthru
          _
        // Predicated region
        $region53: #{bert_classifier_forward.1} parent=11 // pred_check
          %p530 = pneg %p312
        $region54: #{bert_classifier_forward.1} parent=11 // pred_check_branch
          %532 = sbr.rel (%p530) target = $region56
        $region55: #{bert_classifier_forward.1} parent=11 // pred_region
          _
        $region56: #{bert_classifier_forward.1} parent=11 // pred_fallthru
          _
        // Predicated region
        $region57: #{bert_classifier_forward.1} parent=11 // pred_check
          %p533 = pneg %p333
        $region58: #{bert_classifier_forward.1} parent=11 // pred_check_branch
          %535 = sbr.rel (%p533) target = $region60
        $region59: #{bert_classifier_forward.1} parent=11 // pred_region
          _
        $region60: #{bert_classifier_forward.1} parent=11 // pred_fallthru
          _
        // Predicated region
        $region61: #{bert_classifier_forward.1} parent=11 // pred_check
          %p536 = pneg %p354
        $region62: #{bert_classifier_forward.1} parent=11 // pred_check_branch
          %538 = sbr.rel (%p536) target = $region64
        $region63: #{bert_classifier_forward.1} parent=11 // pred_region
          _
        $region64: #{bert_classifier_forward.1} parent=11 // pred_fallthru
          _
        // Predicated region
        $region65: #{bert_classifier_forward.1} parent=11 // pred_check
          %p539 = pneg %p375
        $region66: #{bert_classifier_forward.1} parent=11 // pred_check_branch
          %541 = sbr.rel (%p539) target = $region68
        $region67: #{bert_classifier_forward.1} parent=11 // pred_region
          _
        $region68: #{bert_classifier_forward.1} parent=11 // pred_fallthru
          _
        // Predicated region
        $region69: #{bert_classifier_forward.1} parent=11 // pred_check
          %p542 = pneg %p396
        $region70: #{bert_classifier_forward.1} parent=11 // pred_check_branch
          %544 = sbr.rel (%p542) target = $region72
        $region71: #{bert_classifier_forward.1} parent=11 // pred_region
          _
        $region72: #{bert_classifier_forward.1} parent=11 // pred_fallthru
          _
        // Predicated region
        $region73: #{bert_classifier_forward.1} parent=11 // pred_check
          %p545 = pneg %p417
        $region74: #{bert_classifier_forward.1} parent=11 // pred_check_branch
          %547 = sbr.rel (%p545) target = $region76
        $region75: #{bert_classifier_forward.1} parent=11 // pred_region
          _
        $region76: #{bert_classifier_forward.1} parent=11 // pred_fallthru
          _
        // Predicated region
        $region77: #{bert_classifier_forward.1} parent=11 // pred_check
          %p548 = pneg %p438
        $region78: #{bert_classifier_forward.1} parent=11 // pred_check_branch
          %550 = sbr.rel (%p548) target = $region80
        $region79: #{bert_classifier_forward.1} parent=11 // pred_region
          _
        $region80: #{bert_classifier_forward.1} parent=11 // pred_fallthru
          _
        // Predicated region
        $region81: #{bert_classifier_forward.1} parent=11 // pred_check
          %p551 = pneg %p459
        $region82: #{bert_classifier_forward.1} parent=11 // pred_check_branch
          %553 = sbr.rel (%p551) target = $region84
        $region83: #{bert_classifier_forward.1} parent=11 // pred_region
          _
        $region84: #{bert_classifier_forward.1} parent=11 // pred_fallthru
          _
      $region12: #{bert_classifier_forward.1} parent=5 // pred_fallthru
        _
      %p554 = scmp.lt.s32.totalorder %s29, 2
      // Predicated region
      $region85: #{bert_classifier_forward.1} parent=5 // pred_check
        %p555 = pneg %p554
      $region86: #{bert_classifier_forward.1} parent=5 // pred_check_branch
        %557 = sbr.rel (%p555) target = $region88
      $region87: #{bert_classifier_forward.1} parent=5 // pred_region
        // Predicated region
        $region89: #{bert_classifier_forward.1} parent=87 // pred_check
          %p558 = pneg %p49
        $region90: #{bert_classifier_forward.1} parent=87 // pred_check_branch
          %560 = sbr.rel (%p558) target = $region92
        $region91: #{bert_classifier_forward.1} parent=87 // pred_region
          %p561 = scmp.lt.s32.totalorder %s29, 1
          %s562 = scalar_select %p561, %s29, 1
          %s563 = smul.addr %s562, 8
          %s564 = scalar_lea.vmem %s0, %s563
        $region92: #{bert_classifier_forward.1} parent=87 // pred_fallthru
          _
        // Predicated region
        $region93: #{bert_classifier_forward.1} parent=87 // pred_check
          %p565 = pneg %p75
        $region94: #{bert_classifier_forward.1} parent=87 // pred_check_branch
          %567 = sbr.rel (%p565) target = $region96
        $region95: #{bert_classifier_forward.1} parent=87 // pred_region
          %p568 = scmp.lt.s32.totalorder %s29, 1
          %s569 = scalar_select %p568, %s29, 1
          %s570 = scalar_lea.vmem %s1, %s569
        $region96: #{bert_classifier_forward.1} parent=87 // pred_fallthru
          _
      $region88: #{bert_classifier_forward.1} parent=5 // pred_fallthru
        _
      %p571 = scmp.le.s32.totalorder 1, %s29
      %p572 = scmp.lt.s32.totalorder %s29, 3
      %p573 = pnand %p571, %p572
      %p574 = pneg %p573
      // Predicated region
      $region97: #{bert_classifier_forward.1} parent=5 // pred_check
        _
      $region98: #{bert_classifier_forward.1} parent=5 // pred_check_branch
        %576 = sbr.rel (%p573) target = $region100
      $region99: #{bert_classifier_forward.1} parent=5 // pred_region
        %s577 = ssub.s32 %s29, 1
        %p578 = scmp.lt.s32.totalorder %s34, 1
        %s579 = scalar_select %p578, %s34, 1
        %s580 = smul.addr %s579, 8
        %s581 = scalar_lea.vmem %s0, %s580
        %p582 = pneg %p55
        %p583 = pneg %p52
        %p584 = scmp.lt.s32.totalorder %s34, 1
        %s585 = scalar_select %p584, %s34, 1
        %s586 = scalar_lea.vmem %s1, %s585
        %p587 = pneg %p81
        %p588 = pneg %p78
        %p589 = pneg %p102
        %p590 = pneg %p99
        %p591 = pneg %p123
        %p592 = pneg %p120
        %p593 = pneg %p144
        %p594 = pneg %p141
        %p595 = pneg %p165
        %p596 = pneg %p162
        %p597 = pneg %p186
        %p598 = pneg %p183
        %p599 = pneg %p207
        %p600 = pneg %p204
        %p601 = pneg %p228
        %p602 = pneg %p225
        %p603 = pneg %p249
        %p604 = pneg %p246
        %p605 = pneg %p270
        %p606 = pneg %p267
        %p607 = pneg %p291
        %p608 = pneg %p288
        %p609 = pneg %p312
        %p610 = pneg %p309
        %p611 = pneg %p333
        %p612 = pneg %p330
        %p613 = pneg %p354
        %p614 = pneg %p351
        %p615 = pneg %p375
        %p616 = pneg %p372
        %p617 = pneg %p396
        %p618 = pneg %p393
        %p619 = pneg %p417
        %p620 = pneg %p414
        %p621 = pneg %p438
        %p622 = pneg %p435
        %p623 = pneg %p459
        %p624 = pneg %p456
        %p625 = pneg %p485
        %p626 = pneg %p482
        %s627 = sand.u32 %s472, 1
        %s628 = scalar_lea.sflag [#allocation3], %s627
        %s629 = sand.u32 %s472, 1
        %s630 = scalar_lea.vmem [#allocation2], %s629
        %p631 = scmp.lt.s32.totalorder %s34, 1
        %s632 = scalar_select %p631, %s34, 1
        %s633 = smul.addr %s632, 8
        %s634 = scalar_lea.vmem %s0, %s633
        %p635 = scmp.lt.s32.totalorder %s34, 1
        %s636 = scalar_select %p635, %s34, 1
        %s637 = scalar_lea.vmem %s1, %s636
        %v639 = vld [vmem:[%s634] sm:$0xff]
        %v640 = vld [vmem:[%s2] sm:$0x1]
        %v641 = vld [vmem:[%s3] sm:$0x1]
        %vm642 = vcmask 261120
        %v643 = vsel %vm642, %v639, 0.0
        %644 = vadd.xlane.f32.xlu0 %v643
        %v645 = vpop.xlane.xlu0 %644
        %v646 = vrcp.pop 32.0
        %v647 = vmul.f32 32.0, %v646
        %v648 = vsub.f32 1.0, %v647
        %v649 = vmul.f32 %v646, %v648
        %v650 = vadd.f32 %v646, %v649
        %vm651 = vweird.f32 %v646
        %v652 = vsel %vm651, %v646, %v650
        %v653 = vmul.f32 %v645, %v652
        %v654 = vsub.f32 %v639, %v653
        %v655 = vmul.f32 %v654, %v654
        %v656 = vsel %vm642, %v655, 0.0
        %657 = vadd.xlane.f32.xlu0 %v656
        %v658 = vpop.xlane.xlu0 %657
        %v659 = vmul.f32 %v658, %v652
        %v660 = vadd.f32 %v659, 1e-12
        %v661 = vrsqrt.pop %v660
        %v662 = vmul.f32 %v661, %v660
        %v663 = vmul.f32 %v662, %v661
        %v664 = vmul.f32 0.5, %v663
        %v665 = vsub.f32 1.5, %v664
        %v666 = vmul.f32 %v661, %v665
        %vm667 = vweird.f32 %v660
        %vm668 = vweird.f32 %v661
        %vm669 = vmor %vm667, %vm668
        %v670 = vsel %vm669, %v661, %v666
        %v671 = vmul.f32 %v654, %v670
        %v673 = vperm.slane %v640, 0
        %v675 = vmul.f32 %v671, %v673
        %v677 = vperm.slane %v641, 0
        %v679 = vadd.f32 %v675, %v677
        %v680 = vld [vmem:[%s637] sm:$0x1]
        %v681 = vpack.c.bf16 %v679, %v679
        %v682 = vld [vmem:[%s4] sm:$0xf]
        %v683 = vld [vmem:[%s4 + $0x4] sm:$0xf]
        %v684 = vld [vmem:[%s4 + $0x8] sm:$0xf]
        %v685 = vld [vmem:[%s4 + $0xc] sm:$0xf]
        %v686 = vld [vmem:[%s4 + $0x10] sm:$0xf]
        %v687 = vld [vmem:[%s4 + $0x14] sm:$0xf]
        %v688 = vld [vmem:[%s4 + $0x18] sm:$0xf]
        %v689 = vld [vmem:[%s4 + $0x1c] sm:$0xf]
        %v690 = vld [vmem:[%s4 + $0x20] sm:$0xf]
        %v691 = vld [vmem:[%s4 + $0x24] sm:$0xf]
        %v692 = vld [vmem:[%s4 + $0x28] sm:$0xf]
        %v693 = vld [vmem:[%s4 + $0x2c] sm:$0xf]
        %v694 = vld [vmem:[%s4 + $0x30] sm:$0xf]
        %v695 = vld [vmem:[%s4 + $0x34] sm:$0xf]
        %v696 = vld [vmem:[%s4 + $0x38] sm:$0xf]
        %v697 = vld [vmem:[%s4 + $0x3c] sm:$0xf]
        %v698 = vld [vmem:[%s4 + $0x40] sm:$0xf]
        %v699 = vld [vmem:[%s4 + $0x44] sm:$0xf]
        %v700 = vld [vmem:[%s4 + $0x48] sm:$0xf]
        %v701 = vld [vmem:[%s4 + $0x4c] sm:$0xf]
        %v702 = vld [vmem:[%s4 + $0x50] sm:$0xf]
        %v703 = vld [vmem:[%s4 + $0x54] sm:$0xf]
        %v704 = vld [vmem:[%s4 + $0x58] sm:$0xf]
        %v705 = vld [vmem:[%s4 + $0x5c] sm:$0xf]
        %v706 = vld [vmem:[%s5] sm:$0x1]
        %v707 = vld [vmem:[%s5 + $0x1] sm:$0x1]
        %v708 = vld [vmem:[%s5 + $0x2] sm:$0x1]
        %v709 = vld [vmem:[%s5 + $0x3] sm:$0x1]
        %v710 = vld [vmem:[%s5 + $0x4] sm:$0x1]
        %v711 = vld [vmem:[%s5 + $0x5] sm:$0x1]
        %v718 = vperm.slane %v706, 0
        %v719 = vperm.slane %v707, 0
        %v720 = vperm.slane %v708, 0
        %v721 = vperm.slane %v709, 0
        %v722 = vperm.slane %v710, 0
        %v723 = vperm.slane %v711, 0
        %v734 = vunpack.c.l.b16 %v682
        %v735 = vunpack.c.l.b16 %v683
        %v736 = vunpack.c.l.b16 %v684
        %v737 = vunpack.c.l.b16 %v685
        %v738 = vpack.c.b16 %v735, %v734
        %v739 = vpack.c.b16 %v737, %v736
        %v743 = vsel %vm642, %v681, 0
        %745 = vmatpush.bf16.msra.mxu0 0
        %746 = vmatpush.bf16.msra.mxu0 0
        %747 = vmatpush.bf16.msra.mxu0 0
        %748 = vmatpush.bf16.msra.mxu0 0
        %749 = vmatpush.bf16.msra.mxu0 0
        %750 = vmatpush.bf16.msra.mxu0 0
        %751 = vmatpush.bf16.msra.mxu0 %v739
        %752 = vmatpush.bf16.msra.mxu0 %v738
        %753 = vmatmul.bf16.gmra.mxu0 %v743
        %v754 = vpop.f32.mrf.mxu0
        %v755 = vadd.f32 %v718, %v754
        %v756 = vpop.f32.mrf.mxu0
        %757 = vdwg.mxu0
        %v762 = vunpack.c.l.b16 %v686
        %v763 = vunpack.c.l.b16 %v687
        %v764 = vunpack.c.l.b16 %v688
        %v765 = vunpack.c.l.b16 %v689
        %v766 = vpack.c.b16 %v763, %v762
        %v767 = vpack.c.b16 %v765, %v764
        %770 = vmatpush.bf16.msra.mxu0 0
        %771 = vmatpush.bf16.msra.mxu0 0
        %772 = vmatpush.bf16.msra.mxu0 0
        %773 = vmatpush.bf16.msra.mxu0 0
        %774 = vmatpush.bf16.msra.mxu0 0
        %775 = vmatpush.bf16.msra.mxu0 0
        %776 = vmatpush.bf16.msra.mxu0 %v767
        %777 = vmatpush.bf16.msra.mxu0 %v766
        %778 = vmatmul.bf16.gmra.mxu0 %v743
        %v779 = vpop.f32.mrf.mxu0
        %v780 = vadd.f32 %v719, %v779
        %v781 = vpop.f32.mrf.mxu0
        %782 = vdwg.mxu0
        %v787 = vunpack.c.l.b16 %v690
        %v788 = vunpack.c.l.b16 %v691
        %v789 = vunpack.c.l.b16 %v692
        %v790 = vunpack.c.l.b16 %v693
        %v791 = vpack.c.b16 %v788, %v787
        %v792 = vpack.c.b16 %v790, %v789
        %795 = vmatpush.bf16.msra.mxu0 0
        %796 = vmatpush.bf16.msra.mxu0 0
        %797 = vmatpush.bf16.msra.mxu0 0
        %798 = vmatpush.bf16.msra.mxu0 0
        %799 = vmatpush.bf16.msra.mxu0 0
        %800 = vmatpush.bf16.msra.mxu0 0
        %801 = vmatpush.bf16.msra.mxu0 %v792
        %802 = vmatpush.bf16.msra.mxu0 %v791
        %803 = vmatmul.bf16.gmra.mxu0 %v743
        %v804 = vpop.f32.mrf.mxu0
        %v805 = vadd.f32 %v720, %v804
        %v806 = vpop.f32.mrf.mxu0
        %807 = vdwg.mxu0
        %v812 = vunpack.c.l.b16 %v694
        %v813 = vunpack.c.l.b16 %v695
        %v814 = vunpack.c.l.b16 %v696
        %v815 = vunpack.c.l.b16 %v697
        %v816 = vpack.c.b16 %v813, %v812
        %v817 = vpack.c.b16 %v815, %v814
        %820 = vmatpush.bf16.msra.mxu0 0
        %821 = vmatpush.bf16.msra.mxu0 0
        %822 = vmatpush.bf16.msra.mxu0 0
        %823 = vmatpush.bf16.msra.mxu0 0
        %824 = vmatpush.bf16.msra.mxu0 0
        %825 = vmatpush.bf16.msra.mxu0 0
        %826 = vmatpush.bf16.msra.mxu0 %v817
        %827 = vmatpush.bf16.msra.mxu0 %v816
        %828 = vmatmul.bf16.gmra.mxu0 %v743
        %v829 = vpop.f32.mrf.mxu0
        %v830 = vadd.f32 %v721, %v829
        %v831 = vpop.f32.mrf.mxu0
        %832 = vdwg.mxu0
        %v837 = vunpack.c.l.b16 %v698
        %v838 = vunpack.c.l.b16 %v699
        %v839 = vunpack.c.l.b16 %v700
        %v840 = vunpack.c.l.b16 %v701
        %v841 = vpack.c.b16 %v838, %v837
        %v842 = vpack.c.b16 %v840, %v839
        %845 = vmatpush.bf16.msra.mxu0 0
        %846 = vmatpush.bf16.msra.mxu0 0
        %847 = vmatpush.bf16.msra.mxu0 0
        %848 = vmatpush.bf16.msra.mxu0 0
        %849 = vmatpush.bf16.msra.mxu0 0
        %850 = vmatpush.bf16.msra.mxu0 0
        %851 = vmatpush.bf16.msra.mxu0 %v842
        %852 = vmatpush.bf16.msra.mxu0 %v841
        %853 = vmatmul.bf16.gmra.mxu0 %v743
        %v854 = vpop.f32.mrf.mxu0
        %v855 = vadd.f32 %v722, %v854
        %v856 = vpop.f32.mrf.mxu0
        %857 = vdwg.mxu0
        %v862 = vunpack.c.l.b16 %v702
        %v863 = vunpack.c.l.b16 %v703
        %v864 = vunpack.c.l.b16 %v704
        %v865 = vunpack.c.l.b16 %v705
        %v866 = vpack.c.b16 %v863, %v862
        %v867 = vpack.c.b16 %v865, %v864
        %870 = vmatpush.bf16.msra.mxu0 0
        %871 = vmatpush.bf16.msra.mxu0 0
        %872 = vmatpush.bf16.msra.mxu0 0
        %873 = vmatpush.bf16.msra.mxu0 0
        %874 = vmatpush.bf16.msra.mxu0 0
        %875 = vmatpush.bf16.msra.mxu0 0
        %876 = vmatpush.bf16.msra.mxu0 %v867
        %877 = vmatpush.bf16.msra.mxu0 %v866
        %878 = vmatmul.bf16.gmra.mxu0 %v743
        %v879 = vpop.f32.mrf.mxu0
        %v880 = vadd.f32 %v723, %v879
        %v881 = vpop.f32.mrf.mxu0
        %882 = vdwg.mxu0
        %v883 = vpack.c.bf16 %v755, %v755
        %v884 = vpack.c.bf16 %v780, %v780
        %v885 = vpack.c.bf16 %v805, %v805
        %v886 = vpack.c.bf16 %v830, %v830
        %vm887 = vcmask 130048
        %v889 = vsel %vm887, %v883, 0
        %v892 = vsel %vm887, %v885, 0
        %894 = vmatpush.bf16.xpose.msra.mxu0 0
        %895 = vmatpush.bf16.xpose.msra.mxu0 0
        %896 = vmatpush.bf16.xpose.msra.mxu0 0
        %897 = vmatpush.bf16.xpose.msra.mxu0 0
        %898 = vmatpush.bf16.xpose.msra.mxu0 0
        %899 = vmatpush.bf16.xpose.msra.mxu0 0
        %900 = vmatpush.bf16.xpose.msra.mxu0 0
        %901 = vmatpush.bf16.xpose.msra.mxu0 %v892
        %902 = vmatmul.bf16.gmra.mxu0 %v889
        %v903 = vpop.f32.mrf.mxu0
        %v904 = vadd.f32 0.0, %v903
        %v905 = vpop.f32.mrf.mxu0
        %906 = vdwg.mxu0
        %v908 = vsel %vm887, %v884, 0
        %v911 = vsel %vm887, %v886, 0
        %913 = vmatpush.bf16.xpose.msra.mxu0 0
        %914 = vmatpush.bf16.xpose.msra.mxu0 0
        %915 = vmatpush.bf16.xpose.msra.mxu0 0
        %916 = vmatpush.bf16.xpose.msra.mxu0 0
        %917 = vmatpush.bf16.xpose.msra.mxu0 0
        %918 = vmatpush.bf16.xpose.msra.mxu0 0
        %919 = vmatpush.bf16.xpose.msra.mxu0 0
        %920 = vmatpush.bf16.xpose.msra.mxu0 %v911
        %921 = vmatmul.bf16.gmra.mxu0 %v908
        %v922 = vpop.f32.mrf.mxu0
        %v923 = vadd.f32 0.0, %v922
        %v924 = vpop.f32.mrf.mxu0
        %925 = vdwg.mxu0
        %v926 = vmul.f32 %v904, 0.25
        %v927 = vmul.f32 %v923, 0.25
        %v929 = vperm.slane %v680, 0
        %v931 = vadd.f32 %v926, %v929
        %v932 = vadd.f32 %v927, %v929
        %vm933 = vcmask 64512
        %v934 = vsel %vm933, %v931, -inf
        %935 = vmax.xlane.f32.xlu0 %v934
        %v936 = vpop.xlane.xlu0 %935
        %v937 = vsel %vm933, %v932, -inf
        %938 = vmax.xlane.f32.xlu0 %v937
        %v939 = vpop.xlane.xlu0 %938
        %v940 = vsub.f32 %v931, %v936
        %v941 = vsub.f32 %v932, %v939
        %v942 = vmul.f32 %v940, 1.442695
        %v943 = vpow.pop %v942
        %v944 = vmul.f32 %v941, 1.442695
        %v945 = vpow.pop %v944
        %v946 = vsel %vm933, %v943, 0.0
        %947 = vadd.xlane.f32.xlu0 %v946
        %v948 = vpop.xlane.xlu0 %947
        %v949 = vsel %vm933, %v945, 0.0
        %950 = vadd.xlane.f32.xlu0 %v949
        %v951 = vpop.xlane.xlu0 %950
        %v952 = vrcp.pop %v948
        %v953 = vrcp.pop %v951
        %v954 = vmul.f32 %v943, %v952
        %v955 = vmul.f32 %v945, %v953
        %v956 = vpack.c.bf16 %v954, %v954
        %v957 = vpack.c.bf16 %v955, %v955
        %v958 = vpack.c.bf16 %v855, %v855
        %v959 = vpack.c.bf16 %v880, %v880
        %v961 = vsel %vm933, %v956, 0
        %vm963 = vcmask 1043456
        %v965 = vsel %vm963, %v958, 0
        %967 = vmatpush.bf16.msra.mxu0 0
        %968 = vmatpush.bf16.msra.mxu0 0
        %969 = vmatpush.bf16.msra.mxu0 0
        %970 = vmatpush.bf16.msra.mxu0 0
        %971 = vmatpush.bf16.msra.mxu0 0
        %972 = vmatpush.bf16.msra.mxu0 0
        %973 = vmatpush.bf16.msra.mxu0 0
        %974 = vmatpush.bf16.msra.mxu0 %v965
        %975 = vmatmul.bf16.gmra.mxu0 %v961
        %v976 = vpop.f32.mrf.mxu0
        %v977 = vadd.f32 0.0, %v976
        %v978 = vpop.f32.mrf.mxu0
        %979 = vdwg.mxu0
        %v981 = vsel %vm933, %v957, 0
        %v984 = vsel %vm963, %v959, 0
        %986 = vmatpush.bf16.msra.mxu0 0
        %987 = vmatpush.bf16.msra.mxu0 0
        %988 = vmatpush.bf16.msra.mxu0 0
        %989 = vmatpush.bf16.msra.mxu0 0
        %990 = vmatpush.bf16.msra.mxu0 0
        %991 = vmatpush.bf16.msra.mxu0 0
        %992 = vmatpush.bf16.msra.mxu0 0
        %993 = vmatpush.bf16.msra.mxu0 %v984
        %994 = vmatmul.bf16.gmra.mxu0 %v981
        %v995 = vpop.f32.mrf.mxu0
        %v996 = vadd.f32 0.0, %v995
        %v997 = vpop.f32.mrf.mxu0
        %998 = vdwg.mxu0
        %v999 = vpack.c.bf16 %v977, %v977
        %v1000 = vpack.c.bf16 %v996, %v996
        %v1001 = vld [vmem:[%s6] sm:$0xf]
        %v1002 = vld [vmem:[%s6 + $0x4] sm:$0xf]
        %v1003 = vld [vmem:[%s6 + $0x8] sm:$0xf]
        %v1004 = vld [vmem:[%s6 + $0xc] sm:$0xf]
        %v1007 = vunpack.c.l.b16 %v1001
        %v1008 = vunpack.c.l.b16 %v1002
        %v1009 = vpack.c.b16 %v1008, %v1007
        %v1012 = vsel %vm887, %v999, 0
        %1014 = vmatpush.bf16.msra.mxu0 0
        %1015 = vmatpush.bf16.msra.mxu0 0
        %1016 = vmatpush.bf16.msra.mxu0 0
        %1017 = vmatpush.bf16.msra.mxu0 0
        %1018 = vmatpush.bf16.msra.mxu0 0
        %1019 = vmatpush.bf16.msra.mxu0 0
        %1020 = vmatpush.bf16.msra.mxu0 0
        %1021 = vmatpush.bf16.msra.mxu0 %v1009
        %1022 = vmatmul.bf16.gmra.mxu0 %v1012
        %v1023 = vpop.f32.mrf.mxu0
        %v1024 = vadd.f32 0.0, %v1023
        %v1025 = vpop.f32.mrf.mxu0
        %1026 = vdwg.mxu0
        %v1029 = vunpack.c.l.b16 %v1003
        %v1030 = vunpack.c.l.b16 %v1004
        %v1031 = vpack.c.b16 %v1030, %v1029
        %v1034 = vsel %vm887, %v1000, 0
        %1036 = vmatpush.bf16.msra.mxu0 0
        %1037 = vmatpush.bf16.msra.mxu0 0
        %1038 = vmatpush.bf16.msra.mxu0 0
        %1039 = vmatpush.bf16.msra.mxu0 0
        %1040 = vmatpush.bf16.msra.mxu0 0
        %1041 = vmatpush.bf16.msra.mxu0 0
        %1042 = vmatpush.bf16.msra.mxu0 0
        %1043 = vmatpush.bf16.msra.mxu0 %v1031
        %1044 = vmatmul.bf16.gmra.mxu0 %v1034
        %v1045 = vpop.f32.mrf.mxu0
        %v1046 = vadd.f32 0.0, %v1045
        %v1047 = vpop.f32.mrf.mxu0
        %1048 = vdwg.mxu0
        %v1049 = vsel %vm642, %v1024, 0.0
        %v1050 = vsel %vm642, %v1046, 0.0
        %v1051 = vadd.f32 %v1049, %v1050
        %v1052 = vld [vmem:[%s7] sm:$0x1]
        %v1054 = vperm.slane %v1052, 0
        %v1056 = vadd.f32 %v1051, %v1054
        %v1057 = vadd.f32 %v1056, %v679
        %v1058 = vld [vmem:[%s8] sm:$0x1]
        %v1059 = vld [vmem:[%s9] sm:$0x1]
        %v1060 = vsel %vm642, %v1057, 0.0
        %1061 = vadd.xlane.f32.xlu0 %v1060
        %v1062 = vpop.xlane.xlu0 %1061
        %v1063 = vmul.f32 %v1062, %v652
        %v1064 = vsub.f32 %v1057, %v1063
        %v1065 = vmul.f32 %v1064, %v1064
        %v1066 = vsel %vm642, %v1065, 0.0
        %1067 = vadd.xlane.f32.xlu0 %v1066
        %v1068 = vpop.xlane.xlu0 %1067
        %v1069 = vmul.f32 %v1068, %v652
        %v1070 = vadd.f32 %v1069, 1e-12
        %v1071 = vrsqrt.pop %v1070
        %v1072 = vmul.f32 %v1071, %v1070
        %v1073 = vmul.f32 %v1072, %v1071
        %v1074 = vmul.f32 0.5, %v1073
        %v1075 = vsub.f32 1.5, %v1074
        %v1076 = vmul.f32 %v1071, %v1075
        %vm1077 = vweird.f32 %v1070
        %vm1078 = vweird.f32 %v1071
        %vm1079 = vmor %vm1077, %vm1078
        %v1080 = vsel %vm1079, %v1071, %v1076
        %v1081 = vmul.f32 %v1064, %v1080
        %v1083 = vperm.slane %v1058, 0
        %v1085 = vmul.f32 %v1081, %v1083
        %v1087 = vperm.slane %v1059, 0
        %v1089 = vadd.f32 %v1085, %v1087
        %v1090 = vpack.c.bf16 %v1089, %v1089
        %v1091 = vld [vmem:[%s10] sm:$0xf]
        %v1092 = vld [vmem:[%s10 + $0x4] sm:$0xf]
        %v1093 = vld [vmem:[%s10 + $0x8] sm:$0xf]
        %v1094 = vld [vmem:[%s10 + $0xc] sm:$0xf]
        %v1095 = vld [vmem:[%s11] sm:$0x1]
        %v1097 = vperm.slane %v1095, 0
        %v1103 = vunpack.c.l.b16 %v1091
        %v1104 = vunpack.c.l.b16 %v1092
        %v1105 = vunpack.c.l.b16 %v1093
        %v1106 = vunpack.c.l.b16 %v1094
        %v1107 = vpack.c.b16 %v1104, %v1103
        %v1108 = vpack.c.b16 %v1106, %v1105
        %v1112 = vsel %vm642, %v1090, 0
        %1114 = vmatpush.bf16.msra.mxu0 0
        %1115 = vmatpush.bf16.msra.mxu0 0
        %1116 = vmatpush.bf16.msra.mxu0 0
        %1117 = vmatpush.bf16.msra.mxu0 0
        %1118 = vmatpush.bf16.msra.mxu0 0
        %1119 = vmatpush.bf16.msra.mxu0 0
        %1120 = vmatpush.bf16.msra.mxu0 %v1108
        %1121 = vmatpush.bf16.msra.mxu0 %v1107
        %1122 = vmatmul.bf16.gmra.mxu0 %v1112
        %v1123 = vpop.f32.mrf.mxu0
        %v1124 = vadd.f32 %v1097, %v1123
        %v1125 = vpop.f32.mrf.mxu0
        %1126 = vdwg.mxu0
        %v1127 = vmul.f32 %v1124, 0.5
        %v1128 = vmul.f32 %v1124, 0.044715
        %v1129 = vmul.f32 %v1128, %v1124
        %v1130 = vmul.f32 %v1129, %v1124
        %v1131 = vadd.f32 %v1124, %v1130
        %v1132 = vmul.f32 %v1131, 0.7978846
        %v1133 = vtanh.pop %v1132
        %v1134 = vadd.f32 %v1133, 1.0
        %v1135 = vmul.f32 %v1127, %v1134
        %v1136 = vpack.c.bf16 %v1135, %v1135
        %v1137 = vld [vmem:[%s12] sm:$0xf]
        %v1138 = vld [vmem:[%s12 + $0x4] sm:$0xf]
        %v1139 = vld [vmem:[%s12 + $0x8] sm:$0xf]
        %v1140 = vld [vmem:[%s12 + $0xc] sm:$0xf]
        %v1141 = vld [vmem:[%s12 + $0x10] sm:$0xf]
        %v1142 = vld [vmem:[%s12 + $0x14] sm:$0xf]
        %v1143 = vld [vmem:[%s12 + $0x18] sm:$0xf]
        %v1144 = vld [vmem:[%s12 + $0x1c] sm:$0xf]
        %v1145 = vld [vmem:[%s13] sm:$0x1]
        %v1147 = vperm.slane %v1145, 0
        %v1157 = vunpack.c.l.b16 %v1137
        %v1158 = vunpack.c.l.b16 %v1138
        %v1159 = vunpack.c.l.b16 %v1139
        %v1160 = vunpack.c.l.b16 %v1140
        %v1161 = vunpack.c.l.b16 %v1141
        %v1162 = vunpack.c.l.b16 %v1142
        %v1163 = vunpack.c.l.b16 %v1143
        %v1164 = vunpack.c.l.b16 %v1144
        %v1165 = vpack.c.b16 %v1158, %v1157
        %v1166 = vpack.c.b16 %v1160, %v1159
        %v1167 = vpack.c.b16 %v1162, %v1161
        %v1168 = vpack.c.b16 %v1164, %v1163
        %vm1173 = vcmask 523264
        %v1175 = vsel %vm1173, %v1136, 0
        %1177 = vmatpush.bf16.msra.mxu0 0
        %1178 = vmatpush.bf16.msra.mxu0 0
        %1179 = vmatpush.bf16.msra.mxu0 0
        %1180 = vmatpush.bf16.msra.mxu0 0
        %1181 = vmatpush.bf16.msra.mxu0 %v1168
        %1182 = vmatpush.bf16.msra.mxu0 %v1167
        %1183 = vmatpush.bf16.msra.mxu0 %v1166
        %1184 = vmatpush.bf16.msra.mxu0 %v1165
        %1185 = vmatmul.bf16.gmra.mxu0 %v1175
        %v1186 = vpop.f32.mrf.mxu0
        %v1187 = vadd.f32 %v1147, %v1186
        %v1188 = vpop.f32.mrf.mxu0
        %1189 = vdwg.mxu0
        %v1190 = vadd.f32 %v1187, %v1089
        %v1191 = vld [vmem:[%s14] sm:$0x1]
        %v1192 = vld [vmem:[%s15] sm:$0x1]
        %v1193 = vsel %vm642, %v1190, 0.0
        %1194 = vadd.xlane.f32.xlu0 %v1193
        %v1195 = vpop.xlane.xlu0 %1194
        %v1196 = vmul.f32 %v1195, %v652
        %v1197 = vsub.f32 %v1190, %v1196
        %v1198 = vmul.f32 %v1197, %v1197
        %v1199 = vsel %vm642, %v1198, 0.0
        %1200 = vadd.xlane.f32.xlu0 %v1199
        %v1201 = vpop.xlane.xlu0 %1200
        %v1202 = vmul.f32 %v1201, %v652
        %v1203 = vadd.f32 %v1202, 1e-12
        %v1204 = vrsqrt.pop %v1203
        %v1205 = vmul.f32 %v1204, %v1203
        %v1206 = vmul.f32 %v1205, %v1204
        %v1207 = vmul.f32 0.5, %v1206
        %v1208 = vsub.f32 1.5, %v1207
        %v1209 = vmul.f32 %v1204, %v1208
        %vm1210 = vweird.f32 %v1203
        %vm1211 = vweird.f32 %v1204
        %vm1212 = vmor %vm1210, %vm1211
        %v1213 = vsel %vm1212, %v1204, %v1209
        %v1214 = vmul.f32 %v1197, %v1213
        %v1216 = vperm.slane %v1191, 0
        %v1218 = vmul.f32 %v1214, %v1216
        %v1220 = vperm.slane %v1192, 0
        %v1222 = vadd.f32 %v1218, %v1220
        %v1223 = vpack.c.bf16 %v1222, %v1222
        %s1224 = scalar_lea.vmem %s4, 96
        %v1225 = vld [vmem:[%s1224] sm:$0xf]
        %v1226 = vld [vmem:[%s1224 + $0x4] sm:$0xf]
        %v1227 = vld [vmem:[%s1224 + $0x8] sm:$0xf]
        %v1228 = vld [vmem:[%s1224 + $0xc] sm:$0xf]
        %v1229 = vld [vmem:[%s1224 + $0x10] sm:$0xf]
        %v1230 = vld [vmem:[%s1224 + $0x14] sm:$0xf]
        %v1231 = vld [vmem:[%s1224 + $0x18] sm:$0xf]
        %v1232 = vld [vmem:[%s1224 + $0x1c] sm:$0xf]
        %v1233 = vld [vmem:[%s1224 + $0x20] sm:$0xf]
        %v1234 = vld [vmem:[%s1224 + $0x24] sm:$0xf]
        %v1235 = vld [vmem:[%s1224 + $0x28] sm:$0xf]
        %v1236 = vld [vmem:[%s1224 + $0x2c] sm:$0xf]
        %v1237 = vld [vmem:[%s1224 + $0x30] sm:$0xf]
        %v1238 = vld [vmem:[%s1224 + $0x34] sm:$0xf]
        %v1239 = vld [vmem:[%s1224 + $0x38] sm:$0xf]
        %v1240 = vld [vmem:[%s1224 + $0x3c] sm:$0xf]
        %v1241 = vld [vmem:[%s1224 + $0x40] sm:$0xf]
        %v1242 = vld [vmem:[%s1224 + $0x44] sm:$0xf]
        %v1243 = vld [vmem:[%s1224 + $0x48] sm:$0xf]
        %v1244 = vld [vmem:[%s1224 + $0x4c] sm:$0xf]
        %v1245 = vld [vmem:[%s1224 + $0x50] sm:$0xf]
        %v1246 = vld [vmem:[%s1224 + $0x54] sm:$0xf]
        %v1247 = vld [vmem:[%s1224 + $0x58] sm:$0xf]
        %v1248 = vld [vmem:[%s1224 + $0x5c] sm:$0xf]
        %s1249 = scalar_lea.vmem %s5, 6
        %v1250 = vld [vmem:[%s1249] sm:$0x1]
        %v1251 = vld [vmem:[%s1249 + $0x1] sm:$0x1]
        %v1252 = vld [vmem:[%s1249 + $0x2] sm:$0x1]
        %v1253 = vld [vmem:[%s1249 + $0x3] sm:$0x1]
        %v1254 = vld [vmem:[%s1249 + $0x4] sm:$0x1]
        %v1255 = vld [vmem:[%s1249 + $0x5] sm:$0x1]
        %v1262 = vperm.slane %v1250, 0
        %v1263 = vperm.slane %v1251, 0
        %v1264 = vperm.slane %v1252, 0
        %v1265 = vperm.slane %v1253, 0
        %v1266 = vperm.slane %v1254, 0
        %v1267 = vperm.slane %v1255, 0
        %v1278 = vunpack.c.l.b16 %v1225
        %v1279 = vunpack.c.l.b16 %v1226
        %v1280 = vunpack.c.l.b16 %v1227
        %v1281 = vunpack.c.l.b16 %v1228
        %v1282 = vpack.c.b16 %v1279, %v1278
        %v1283 = vpack.c.b16 %v1281, %v1280
        %v1287 = vsel %vm642, %v1223, 0
        %1289 = vmatpush.bf16.msra.mxu0 0
        %1290 = vmatpush.bf16.msra.mxu0 0
        %1291 = vmatpush.bf16.msra.mxu0 0
        %1292 = vmatpush.bf16.msra.mxu0 0
        %1293 = vmatpush.bf16.msra.mxu0 0
        %1294 = vmatpush.bf16.msra.mxu0 0
        %1295 = vmatpush.bf16.msra.mxu0 %v1283
        %1296 = vmatpush.bf16.msra.mxu0 %v1282
        %1297 = vmatmul.bf16.gmra.mxu0 %v1287
        %v1298 = vpop.f32.mrf.mxu0
        %v1299 = vadd.f32 %v1262, %v1298
        %v1300 = vpop.f32.mrf.mxu0
        %1301 = vdwg.mxu0
        %v1306 = vunpack.c.l.b16 %v1229
        %v1307 = vunpack.c.l.b16 %v1230
        %v1308 = vunpack.c.l.b16 %v1231
        %v1309 = vunpack.c.l.b16 %v1232
        %v1310 = vpack.c.b16 %v1307, %v1306
        %v1311 = vpack.c.b16 %v1309, %v1308
        %1314 = vmatpush.bf16.msra.mxu0 0
        %1315 = vmatpush.bf16.msra.mxu0 0
        %1316 = vmatpush.bf16.msra.mxu0 0
        %1317 = vmatpush.bf16.msra.mxu0 0
        %1318 = vmatpush.bf16.msra.mxu0 0
        %1319 = vmatpush.bf16.msra.mxu0 0
        %1320 = vmatpush.bf16.msra.mxu0 %v1311
        %1321 = vmatpush.bf16.msra.mxu0 %v1310
        %1322 = vmatmul.bf16.gmra.mxu0 %v1287
        %v1323 = vpop.f32.mrf.mxu0
        %v1324 = vadd.f32 %v1263, %v1323
        %v1325 = vpop.f32.mrf.mxu0
        %1326 = vdwg.mxu0
        %v1331 = vunpack.c.l.b16 %v1233
        %v1332 = vunpack.c.l.b16 %v1234
        %v1333 = vunpack.c.l.b16 %v1235
        %v1334 = vunpack.c.l.b16 %v1236
        %v1335 = vpack.c.b16 %v1332, %v1331
        %v1336 = vpack.c.b16 %v1334, %v1333
        %1339 = vmatpush.bf16.msra.mxu0 0
        %1340 = vmatpush.bf16.msra.mxu0 0
        %1341 = vmatpush.bf16.msra.mxu0 0
        %1342 = vmatpush.bf16.msra.mxu0 0
        %1343 = vmatpush.bf16.msra.mxu0 0
        %1344 = vmatpush.bf16.msra.mxu0 0
        %1345 = vmatpush.bf16.msra.mxu0 %v1336
        %1346 = vmatpush.bf16.msra.mxu0 %v1335
        %1347 = vmatmul.bf16.gmra.mxu0 %v1287
        %v1348 = vpop.f32.mrf.mxu0
        %v1349 = vadd.f32 %v1264, %v1348
        %v1350 = vpop.f32.mrf.mxu0
        %1351 = vdwg.mxu0
        %v1356 = vunpack.c.l.b16 %v1237
        %v1357 = vunpack.c.l.b16 %v1238
        %v1358 = vunpack.c.l.b16 %v1239
        %v1359 = vunpack.c.l.b16 %v1240
        %v1360 = vpack.c.b16 %v1357, %v1356
        %v1361 = vpack.c.b16 %v1359, %v1358
        %1364 = vmatpush.bf16.msra.mxu0 0
        %1365 = vmatpush.bf16.msra.mxu0 0
        %1366 = vmatpush.bf16.msra.mxu0 0
        %1367 = vmatpush.bf16.msra.mxu0 0
        %1368 = vmatpush.bf16.msra.mxu0 0
        %1369 = vmatpush.bf16.msra.mxu0 0
        %1370 = vmatpush.bf16.msra.mxu0 %v1361
        %1371 = vmatpush.bf16.msra.mxu0 %v1360
        %1372 = vmatmul.bf16.gmra.mxu0 %v1287
        %v1373 = vpop.f32.mrf.mxu0
        %v1374 = vadd.f32 %v1265, %v1373
        %v1375 = vpop.f32.mrf.mxu0
        %1376 = vdwg.mxu0
        %v1381 = vunpack.c.l.b16 %v1241
        %v1382 = vunpack.c.l.b16 %v1242
        %v1383 = vunpack.c.l.b16 %v1243
        %v1384 = vunpack.c.l.b16 %v1244
        %v1385 = vpack.c.b16 %v1382, %v1381
        %v1386 = vpack.c.b16 %v1384, %v1383
        %1389 = vmatpush.bf16.msra.mxu0 0
        %1390 = vmatpush.bf16.msra.mxu0 0
        %1391 = vmatpush.bf16.msra.mxu0 0
        %1392 = vmatpush.bf16.msra.mxu0 0
        %1393 = vmatpush.bf16.msra.mxu0 0
        %1394 = vmatpush.bf16.msra.mxu0 0
        %1395 = vmatpush.bf16.msra.mxu0 %v1386
        %1396 = vmatpush.bf16.msra.mxu0 %v1385
        %1397 = vmatmul.bf16.gmra.mxu0 %v1287
        %v1398 = vpop.f32.mrf.mxu0
        %v1399 = vadd.f32 %v1266, %v1398
        %v1400 = vpop.f32.mrf.mxu0
        %1401 = vdwg.mxu0
        %v1406 = vunpack.c.l.b16 %v1245
        %v1407 = vunpack.c.l.b16 %v1246
        %v1408 = vunpack.c.l.b16 %v1247
        %v1409 = vunpack.c.l.b16 %v1248
        %v1410 = vpack.c.b16 %v1407, %v1406
        %v1411 = vpack.c.b16 %v1409, %v1408
        %1414 = vmatpush.bf16.msra.mxu0 0
        %1415 = vmatpush.bf16.msra.mxu0 0
        %1416 = vmatpush.bf16.msra.mxu0 0
        %1417 = vmatpush.bf16.msra.mxu0 0
        %1418 = vmatpush.bf16.msra.mxu0 0
        %1419 = vmatpush.bf16.msra.mxu0 0
        %1420 = vmatpush.bf16.msra.mxu0 %v1411
        %1421 = vmatpush.bf16.msra.mxu0 %v1410
        %1422 = vmatmul.bf16.gmra.mxu0 %v1287
        %v1423 = vpop.f32.mrf.mxu0
        %v1424 = vadd.f32 %v1267, %v1423
        %v1425 = vpop.f32.mrf.mxu0
        %1426 = vdwg.mxu0
        %v1427 = vpack.c.bf16 %v1299, %v1299
        %v1428 = vpack.c.bf16 %v1324, %v1324
        %v1429 = vpack.c.bf16 %v1349, %v1349
        %v1430 = vpack.c.bf16 %v1374, %v1374
        %v1432 = vsel %vm887, %v1427, 0
        %v1435 = vsel %vm887, %v1429, 0
        %1437 = vmatpush.bf16.xpose.msra.mxu0 0
        %1438 = vmatpush.bf16.xpose.msra.mxu0 0
        %1439 = vmatpush.bf16.xpose.msra.mxu0 0
        %1440 = vmatpush.bf16.xpose.msra.mxu0 0
        %1441 = vmatpush.bf16.xpose.msra.mxu0 0
        %1442 = vmatpush.bf16.xpose.msra.mxu0 0
        %1443 = vmatpush.bf16.xpose.msra.mxu0 0
        %1444 = vmatpush.bf16.xpose.msra.mxu0 %v1435
        %1445 = vmatmul.bf16.gmra.mxu0 %v1432
        %v1446 = vpop.f32.mrf.mxu0
        %v1447 = vadd.f32 0.0, %v1446
        %v1448 = vpop.f32.mrf.mxu0
        %1449 = vdwg.mxu0
        %v1451 = vsel %vm887, %v1428, 0
        %v1454 = vsel %vm887, %v1430, 0
        %1456 = vmatpush.bf16.xpose.msra.mxu0 0
        %1457 = vmatpush.bf16.xpose.msra.mxu0 0
        %1458 = vmatpush.bf16.xpose.msra.mxu0 0
        %1459 = vmatpush.bf16.xpose.msra.mxu0 0
        %1460 = vmatpush.bf16.xpose.msra.mxu0 0
        %1461 = vmatpush.bf16.xpose.msra.mxu0 0
        %1462 = vmatpush.bf16.xpose.msra.mxu0 0
        %1463 = vmatpush.bf16.xpose.msra.mxu0 %v1454
        %1464 = vmatmul.bf16.gmra.mxu0 %v1451
        %v1465 = vpop.f32.mrf.mxu0
        %v1466 = vadd.f32 0.0, %v1465
        %v1467 = vpop.f32.mrf.mxu0
        %1468 = vdwg.mxu0
        %v1469 = vmul.f32 %v1447, 0.25
        %v1470 = vmul.f32 %v1466, 0.25
        %v1471 = vadd.f32 %v1469, %v929
        %v1472 = vadd.f32 %v1470, %v929
        %v1473 = vsel %vm933, %v1471, -inf
        %1474 = vmax.xlane.f32.xlu0 %v1473
        %v1475 = vpop.xlane.xlu0 %1474
        %v1476 = vsel %vm933, %v1472, -inf
        %1477 = vmax.xlane.f32.xlu0 %v1476
        %v1478 = vpop.xlane.xlu0 %1477
        %v1479 = vsub.f32 %v1471, %v1475
        %v1480 = vsub.f32 %v1472, %v1478
        %v1481 = vmul.f32 %v1479, 1.442695
        %v1482 = vpow.pop %v1481
        %v1483 = vmul.f32 %v1480, 1.442695
        %v1484 = vpow.pop %v1483
        %v1485 = vsel %vm933, %v1482, 0.0
        %1486 = vadd.xlane.f32.xlu0 %v1485
        %v1487 = vpop.xlane.xlu0 %1486
        %v1488 = vsel %vm933, %v1484, 0.0
        %1489 = vadd.xlane.f32.xlu0 %v1488
        %v1490 = vpop.xlane.xlu0 %1489
        %v1491 = vrcp.pop %v1487
        %v1492 = vrcp.pop %v1490
        %v1493 = vmul.f32 %v1482, %v1491
        %v1494 = vmul.f32 %v1484, %v1492
        %v1495 = vpack.c.bf16 %v1493, %v1493
        %v1496 = vpack.c.bf16 %v1494, %v1494
        %v1497 = vpack.c.bf16 %v1399, %v1399
        %v1498 = vpack.c.bf16 %v1424, %v1424
        %v1500 = vsel %vm933, %v1495, 0
        %v1503 = vsel %vm963, %v1497, 0
        %1505 = vmatpush.bf16.msra.mxu0 0
        %1506 = vmatpush.bf16.msra.mxu0 0
        %1507 = vmatpush.bf16.msra.mxu0 0
        %1508 = vmatpush.bf16.msra.mxu0 0
        %1509 = vmatpush.bf16.msra.mxu0 0
        %1510 = vmatpush.bf16.msra.mxu0 0
        %1511 = vmatpush.bf16.msra.mxu0 0
        %1512 = vmatpush.bf16.msra.mxu0 %v1503
        %1513 = vmatmul.bf16.gmra.mxu0 %v1500
        %v1514 = vpop.f32.mrf.mxu0
        %v1515 = vadd.f32 0.0, %v1514
        %v1516 = vpop.f32.mrf.mxu0
        %1517 = vdwg.mxu0
        %v1519 = vsel %vm933, %v1496, 0
        %v1522 = vsel %vm963, %v1498, 0
        %1524 = vmatpush.bf16.msra.mxu0 0
        %1525 = vmatpush.bf16.msra.mxu0 0
        %1526 = vmatpush.bf16.msra.mxu0 0
        %1527 = vmatpush.bf16.msra.mxu0 0
        %1528 = vmatpush.bf16.msra.mxu0 0
        %1529 = vmatpush.bf16.msra.mxu0 0
        %1530 = vmatpush.bf16.msra.mxu0 0
        %1531 = vmatpush.bf16.msra.mxu0 %v1522
        %1532 = vmatmul.bf16.gmra.mxu0 %v1519
        %v1533 = vpop.f32.mrf.mxu0
        %v1534 = vadd.f32 0.0, %v1533
        %v1535 = vpop.f32.mrf.mxu0
        %1536 = vdwg.mxu0
        %v1537 = vpack.c.bf16 %v1515, %v1515
        %v1538 = vpack.c.bf16 %v1534, %v1534
        %s1539 = scalar_lea.vmem %s6, 16
        %v1540 = vld [vmem:[%s1539] sm:$0xf]
        %v1541 = vld [vmem:[%s1539 + $0x4] sm:$0xf]
        %v1542 = vld [vmem:[%s1539 + $0x8] sm:$0xf]
        %v1543 = vld [vmem:[%s1539 + $0xc] sm:$0xf]
        %v1546 = vunpack.c.l.b16 %v1540
        %v1547 = vunpack.c.l.b16 %v1541
        %v1548 = vpack.c.b16 %v1547, %v1546
        %v1551 = vsel %vm887, %v1537, 0
        %1553 = vmatpush.bf16.msra.mxu0 0
        %1554 = vmatpush.bf16.msra.mxu0 0
        %1555 = vmatpush.bf16.msra.mxu0 0
        %1556 = vmatpush.bf16.msra.mxu0 0
        %1557 = vmatpush.bf16.msra.mxu0 0
        %1558 = vmatpush.bf16.msra.mxu0 0
        %1559 = vmatpush.bf16.msra.mxu0 0
        %1560 = vmatpush.bf16.msra.mxu0 %v1548
        %1561 = vmatmul.bf16.gmra.mxu0 %v1551
        %v1562 = vpop.f32.mrf.mxu0
        %v1563 = vadd.f32 0.0, %v1562
        %v1564 = vpop.f32.mrf.mxu0
        %1565 = vdwg.mxu0
        %v1568 = vunpack.c.l.b16 %v1542
        %v1569 = vunpack.c.l.b16 %v1543
        %v1570 = vpack.c.b16 %v1569, %v1568
        %v1573 = vsel %vm887, %v1538, 0
        %1575 = vmatpush.bf16.msra.mxu0 0
        %1576 = vmatpush.bf16.msra.mxu0 0
        %1577 = vmatpush.bf16.msra.mxu0 0
        %1578 = vmatpush.bf16.msra.mxu0 0
        %1579 = vmatpush.bf16.msra.mxu0 0
        %1580 = vmatpush.bf16.msra.mxu0 0
        %1581 = vmatpush.bf16.msra.mxu0 0
        %1582 = vmatpush.bf16.msra.mxu0 %v1570
        %1583 = vmatmul.bf16.gmra.mxu0 %v1573
        %v1584 = vpop.f32.mrf.mxu0
        %v1585 = vadd.f32 0.0, %v1584
        %v1586 = vpop.f32.mrf.mxu0
        %1587 = vdwg.mxu0
        %v1588 = vsel %vm642, %v1563, 0.0
        %v1589 = vsel %vm642, %v1585, 0.0
        %v1590 = vadd.f32 %v1588, %v1589
        %s1591 = scalar_lea.vmem %s7, 1
        %v1592 = vld [vmem:[%s1591] sm:$0x1]
        %v1594 = vperm.slane %v1592, 0
        %v1596 = vadd.f32 %v1590, %v1594
        %v1597 = vadd.f32 %v1596, %v1222
        %s1598 = scalar_lea.vmem %s8, 1
        %v1599 = vld [vmem:[%s1598] sm:$0x1]
        %s1600 = scalar_lea.vmem %s9, 1
        %v1601 = vld [vmem:[%s1600] sm:$0x1]
        %v1602 = vsel %vm642, %v1597, 0.0
        %1603 = vadd.xlane.f32.xlu0 %v1602
        %v1604 = vpop.xlane.xlu0 %1603
        %v1605 = vmul.f32 %v1604, %v652
        %v1606 = vsub.f32 %v1597, %v1605
        %v1607 = vmul.f32 %v1606, %v1606
        %v1608 = vsel %vm642, %v1607, 0.0
        %1609 = vadd.xlane.f32.xlu0 %v1608
        %v1610 = vpop.xlane.xlu0 %1609
        %v1611 = vmul.f32 %v1610, %v652
        %v1612 = vadd.f32 %v1611, 1e-12
        %v1613 = vrsqrt.pop %v1612
        %v1614 = vmul.f32 %v1613, %v1612
        %v1615 = vmul.f32 %v1614, %v1613
        %v1616 = vmul.f32 0.5, %v1615
        %v1617 = vsub.f32 1.5, %v1616
        %v1618 = vmul.f32 %v1613, %v1617
        %vm1619 = vweird.f32 %v1612
        %vm1620 = vweird.f32 %v1613
        %vm1621 = vmor %vm1619, %vm1620
        %v1622 = vsel %vm1621, %v1613, %v1618
        %v1623 = vmul.f32 %v1606, %v1622
        %v1625 = vperm.slane %v1599, 0
        %v1627 = vmul.f32 %v1623, %v1625
        %v1629 = vperm.slane %v1601, 0
        %v1631 = vadd.f32 %v1627, %v1629
        %v1632 = vpack.c.bf16 %v1631, %v1631
        %s1633 = scalar_lea.vmem %s10, 16
        %v1634 = vld [vmem:[%s1633] sm:$0xf]
        %v1635 = vld [vmem:[%s1633 + $0x4] sm:$0xf]
        %v1636 = vld [vmem:[%s1633 + $0x8] sm:$0xf]
        %v1637 = vld [vmem:[%s1633 + $0xc] sm:$0xf]
        %s1638 = scalar_lea.vmem %s11, 1
        %v1639 = vld [vmem:[%s1638] sm:$0x1]
        %v1641 = vperm.slane %v1639, 0
        %v1647 = vunpack.c.l.b16 %v1634
        %v1648 = vunpack.c.l.b16 %v1635
        %v1649 = vunpack.c.l.b16 %v1636
        %v1650 = vunpack.c.l.b16 %v1637
        %v1651 = vpack.c.b16 %v1648, %v1647
        %v1652 = vpack.c.b16 %v1650, %v1649
        %v1656 = vsel %vm642, %v1632, 0
        %1658 = vmatpush.bf16.msra.mxu0 0
        %1659 = vmatpush.bf16.msra.mxu0 0
        %1660 = vmatpush.bf16.msra.mxu0 0
        %1661 = vmatpush.bf16.msra.mxu0 0
        %1662 = vmatpush.bf16.msra.mxu0 0
        %1663 = vmatpush.bf16.msra.mxu0 0
        %1664 = vmatpush.bf16.msra.mxu0 %v1652
        %1665 = vmatpush.bf16.msra.mxu0 %v1651
        %1666 = vmatmul.bf16.gmra.mxu0 %v1656
        %v1667 = vpop.f32.mrf.mxu0
        %v1668 = vadd.f32 %v1641, %v1667
        %v1669 = vpop.f32.mrf.mxu0
        %1670 = vdwg.mxu0
        %v1671 = vmul.f32 %v1668, 0.5
        %v1672 = vmul.f32 %v1668, 0.044715
        %v1673 = vmul.f32 %v1672, %v1668
        %v1674 = vmul.f32 %v1673, %v1668
        %v1675 = vadd.f32 %v1668, %v1674
        %v1676 = vmul.f32 %v1675, 0.7978846
        %v1677 = vtanh.pop %v1676
        %v1678 = vadd.f32 %v1677, 1.0
        %v1679 = vmul.f32 %v1671, %v1678
        %v1680 = vpack.c.bf16 %v1679, %v1679
        %s1681 = scalar_lea.vmem %s12, 32
        %v1682 = vld [vmem:[%s1681] sm:$0xf]
        %v1683 = vld [vmem:[%s1681 + $0x4] sm:$0xf]
        %v1684 = vld [vmem:[%s1681 + $0x8] sm:$0xf]
        %v1685 = vld [vmem:[%s1681 + $0xc] sm:$0xf]
        %v1686 = vld [vmem:[%s1681 + $0x10] sm:$0xf]
        %v1687 = vld [vmem:[%s1681 + $0x14] sm:$0xf]
        %v1688 = vld [vmem:[%s1681 + $0x18] sm:$0xf]
        %v1689 = vld [vmem:[%s1681 + $0x1c] sm:$0xf]
        %s1690 = scalar_lea.vmem %s13, 1
        %v1691 = vld [vmem:[%s1690] sm:$0x1]
        %v1693 = vperm.slane %v1691, 0
        %v1703 = vunpack.c.l.b16 %v1682
        %v1704 = vunpack.c.l.b16 %v1683
        %v1705 = vunpack.c.l.b16 %v1684
        %v1706 = vunpack.c.l.b16 %v1685
        %v1707 = vunpack.c.l.b16 %v1686
        %v1708 = vunpack.c.l.b16 %v1687
        %v1709 = vunpack.c.l.b16 %v1688
        %v1710 = vunpack.c.l.b16 %v1689
        %v1711 = vpack.c.b16 %v1704, %v1703
        %v1712 = vpack.c.b16 %v1706, %v1705
        %v1713 = vpack.c.b16 %v1708, %v1707
        %v1714 = vpack.c.b16 %v1710, %v1709
        %v1720 = vsel %vm1173, %v1680, 0
        %1722 = vmatpush.bf16.msra.mxu0 0
        %1723 = vmatpush.bf16.msra.mxu0 0
        %1724 = vmatpush.bf16.msra.mxu0 0
        %1725 = vmatpush.bf16.msra.mxu0 0
        %1726 = vmatpush.bf16.msra.mxu0 %v1714
        %1727 = vmatpush.bf16.msra.mxu0 %v1713
        %1728 = vmatpush.bf16.msra.mxu0 %v1712
        %1729 = vmatpush.bf16.msra.mxu0 %v1711
        %1730 = vmatmul.bf16.gmra.mxu0 %v1720
        %v1731 = vpop.f32.mrf.mxu0
        %v1732 = vadd.f32 %v1693, %v1731
        %v1733 = vpop.f32.mrf.mxu0
        %1734 = vdwg.mxu0
        %v1735 = vadd.f32 %v1732, %v1631
        %s1736 = scalar_lea.vmem %s14, 1
        %v1737 = vld [vmem:[%s1736] sm:$0x1]
        %s1738 = scalar_lea.vmem %s15, 1
        %v1739 = vld [vmem:[%s1738] sm:$0x1]
        %v1740 = vsel %vm642, %v1735, 0.0
        %1741 = vadd.xlane.f32.xlu0 %v1740
        %v1742 = vpop.xlane.xlu0 %1741
        %v1743 = vmul.f32 %v1742, %v652
        %v1744 = vsub.f32 %v1735, %v1743
        %v1745 = vmul.f32 %v1744, %v1744
        %v1746 = vsel %vm642, %v1745, 0.0
        %1747 = vadd.xlane.f32.xlu0 %v1746
        %v1748 = vpop.xlane.xlu0 %1747
        %v1749 = vmul.f32 %v1748, %v652
        %v1750 = vadd.f32 %v1749, 1e-12
        %v1751 = vrsqrt.pop %v1750
        %v1752 = vmul.f32 %v1751, %v1750
        %v1753 = vmul.f32 %v1752, %v1751
        %v1754 = vmul.f32 0.5, %v1753
        %v1755 = vsub.f32 1.5, %v1754
        %v1756 = vmul.f32 %v1751, %v1755
        %vm1757 = vweird.f32 %v1750
        %vm1758 = vweird.f32 %v1751
        %vm1759 = vmor %vm1757, %vm1758
        %v1760 = vsel %vm1759, %v1751, %v1756
        %v1761 = vmul.f32 %v1744, %v1760
        %v1763 = vperm.slane %v1737, 0
        %v1765 = vmul.f32 %v1761, %v1763
        %v1767 = vperm.slane %v1739, 0
        %v1769 = vadd.f32 %v1765, %v1767
        %v1770 = vpack.c.bf16 %v1769, %v1769
        %v1771 = vld [vmem:[%s16] sm:$0xf]
        %v1772 = vld [vmem:[%s16 + $0x4] sm:$0xf]
        %v1773 = vld [vmem:[%s16 + $0x8] sm:$0xf]
        %v1774 = vld [vmem:[%s16 + $0xc] sm:$0xf]
        %v1775 = vld [vmem:[%s17] sm:$0x1]
        %v1780 = vunpack.c.l.b16 %v1771
        %v1781 = vunpack.c.l.b16 %v1772
        %v1782 = vunpack.c.l.b16 %v1773
        %v1783 = vunpack.c.l.b16 %v1774
        %v1784 = vpack.c.b16 %v1781, %v1780
        %v1785 = vpack.c.b16 %v1783, %v1782
        %v1789 = vsel %vm642, %v1770, 0
        %1791 = vmatpush.bf16.msra.mxu0 0
        %1792 = vmatpush.bf16.msra.mxu0 0
        %1793 = vmatpush.bf16.msra.mxu0 0
        %1794 = vmatpush.bf16.msra.mxu0 0
        %1795 = vmatpush.bf16.msra.mxu0 0
        %1796 = vmatpush.bf16.msra.mxu0 0
        %1797 = vmatpush.bf16.msra.mxu0 %v1785
        %1798 = vmatpush.bf16.msra.mxu0 %v1784
        %1799 = vmatmul.bf16.gmra.mxu0 %v1789
        %v1800 = vpop.f32.mrf.mxu0
        %v1801 = vadd.f32 %v1775, %v1800
        %v1802 = vpop.f32.mrf.mxu0
        %1803 = vdwg.mxu0
        %v1804 = vtanh.pop %v1801
        %v1805 = vpack.c.bf16 %v1804, %v1804
        %v1806 = vld [vmem:[%s18] sm:$0xf]
        %v1807 = vld [vmem:[%s18 + $0x4] sm:$0xf]
        %v1808 = vld [vmem:[%s18 + $0x8] sm:$0xf]
        %v1809 = vld [vmem:[%s18 + $0xc] sm:$0xf]
        %v1810 = vld [vmem:[%s19] sm:$0x1]
        %v1815 = vunpack.c.l.b16 %v1806
        %v1816 = vunpack.c.l.b16 %v1807
        %v1817 = vunpack.c.l.b16 %v1808
        %v1818 = vunpack.c.l.b16 %v1809
        %v1819 = vpack.c.b16 %v1816, %v1815
        %v1820 = vpack.c.b16 %v1818, %v1817
        %v1824 = vsel %vm642, %v1805, 0
        %1826 = vmatpush.bf16.msra.mxu0 0
        %1827 = vmatpush.bf16.msra.mxu0 0
        %1828 = vmatpush.bf16.msra.mxu0 0
        %1829 = vmatpush.bf16.msra.mxu0 0
        %1830 = vmatpush.bf16.msra.mxu0 0
        %1831 = vmatpush.bf16.msra.mxu0 0
        %1832 = vmatpush.bf16.msra.mxu0 %v1820
        %1833 = vmatpush.bf16.msra.mxu0 %v1819
        %1834 = vmatmul.bf16.gmra.mxu0 %v1824
        %v1835 = vpop.f32.mrf.mxu0
        %v1836 = vadd.f32 %v1810, %v1835
        %v1837 = vpop.f32.mrf.mxu0
        %1838 = vdwg.mxu0
        %vm1839 = vcmask 16384
        %1840 = vst.msk [vmem:[%s630] sm:$0x1] %vm1839, %v1836
        %s1841 = sand.u32 %s472, 1
        %s1842 = scalar_lea.sflag [#allocation3], %s1841
        %s1843 = sand.u32 %s472, 1
        %s1844 = scalar_lea.vmem [#allocation2], %s1843
        // Predicated region
        $region101: #{bert_classifier_forward.1} parent=99 // pred_check
          %p1845 = pneg %p482
        $region102: #{bert_classifier_forward.1} parent=99 // pred_check_branch
          %1847 = sbr.rel (%p1845) target = $region104
        $region103: #{bert_classifier_forward.1} parent=99 // pred_region
          %1849 = vsyncadd %s1842, 0
          %s1850 = scalar_lea.hbm %s20, %s34
          %s1852 = sshll.u32 %s1844, 4
          %s1853 = int_to_ptr.vmem [resolvable:$true] %s1852
          %s1854 = sshll.u32 %s1850, 4
          %s1855 = int_to_ptr.hbm [resolvable:$true] %s1854
          %1857 = dma.vmem_to_hbm [thread:$0]  %s1853, 16, %s1855, %s1842
        $region104: #{bert_classifier_forward.1} parent=99 // pred_fallthru
          _
      $region100: #{bert_classifier_forward.1} parent=5 // pred_fallthru
        _
      %p1858 = scmp.le.s32.totalorder 2, %s29
      // Predicated region
      $region105: #{bert_classifier_forward.1} parent=5 // pred_check
        %p1859 = pneg %p1858
      $region106: #{bert_classifier_forward.1} parent=5 // pred_check_branch
        %1861 = sbr.rel (%p1859) target = $region108
      $region107: #{bert_classifier_forward.1} parent=5 // pred_region
        %s1862 = ssub.s32 %s29, 2
        // Predicated region
        $region109: #{bert_classifier_forward.1} parent=107 // pred_check
          %p1863 = pneg %p488
        $region110: #{bert_classifier_forward.1} parent=107 // pred_check_branch
          %1865 = sbr.rel (%p1863) target = $region112
        $region111: #{bert_classifier_forward.1} parent=107 // pred_region
          %s1866 = sand.u32 %s473, 1
          %s1867 = scalar_lea.sflag [#allocation3], %s1866
          %s1868 = sand.u32 %s473, 1
          %s1869 = scalar_lea.vmem [#allocation2], %s1868
          %1871 = dma.done %s1867, 16
        $region112: #{bert_classifier_forward.1} parent=107 // pred_fallthru
          _
      $region108: #{bert_classifier_forward.1} parent=5 // pred_fallthru
        _
    $region6: #{bert_classifier_forward.1} parent=1 // loop_footer
      %s33 = sadd.s32 1, %s29
    $region7: #{bert_classifier_forward.1} parent=1 // loop_footer_branch
      %28 = sbr.rel target = $region3
    $region8: #{bert_classifier_forward.1} parent=1 // loop_exit
      _
    %1872 = vsyncpa [#allocation3], 1
    %s1873 = scalar_lea.sflag [#allocation3], 1
    %1874 = vsyncpa %s1873, 1

</llo_original>
